<compile_context>
chip_gen: v6e
topology: v6e:2x2x1
jax: 0.10.0
libtpu: 0.0.40
codegen_flags: <defaults>
</compile_context>

<pallas_src>
import math
import numpy as np

import jax
import jax.numpy as jnp
from jax import lax
from jax.experimental import pallas as pl
from jax.experimental.pallas import tpu as pltpu

# ------------------------- small, consistent configuration -------------------------
N = 8                      # rois per class
NB_CLS = 2                 # num_fg_class
FEAT = 32                  # appearance_feature_dim
GEO = 16                   # geo_feature_dim == fc_dim[0]
G = 4                      # group == fc_dim[1]
DIM = (32, 32, 32)         # (dim0, dim1, dim2)
DG = (DIM[0] // G, DIM[1] // G, DIM[2] // G)   # per-group dims (8, 8, 8)
TOPK = 4                   # topk (<= N, as torch.topk requires)


# ------------------------------- fused Pallas kernel --------------------------------
def fused_relation_kernel(pe_ref, f_ref, wgbig_ref, wgb_ref, wkq_w_ref,
                          wkq_b_ref, conv_w_ref, conv_b_ref, out_ref):
    """Whole forward for one class (its diagonal relation pair):
    WG/WK/WQ linears -> per-group affinity -> top-k row softmax ->
    attention bmm -> grouped 1x1 conv.  All intermediates stay in vregs/VMEM."""
    f = f_ref[...]                                                    # (N, FEAT)

    # ---- WG as a single lane-dense MXU matmul --------------------------------------
    # pe_ref is the (N, N*GEO) = (8,128) diagonal block of the flattened position
    # embedding; wgbig[j*GEO+d, g*N+j'] = wg_w[d,g] * (j==j'), so the output is
    # already in (query i, g*N + key j) layout - no relayout needed.
    wg = jnp.dot(pe_ref[...], wgbig_ref[...],
                 preferred_element_type=jnp.float32) + wgb_ref[...]   # (N, G*N)
    wg = jnp.maximum(wg, 0.0)                                         # ReLU
    lg = jnp.log(jnp.maximum(wg, 1e-6))                               # log(clamp)

    # ---- packed WK|WQ projection: one (N,FEAT)@(FEAT,DIM1+DIM0) matmul -------------
    kq = jnp.dot(f, wkq_w_ref[...],
                 preferred_element_type=jnp.float32) + wkq_b_ref[...]
    wk = kq[:, :DIM[1]]                                               # (N, DIM1)
    wq = kq[:, DIM[1]:]                                               # (N, DIM0)

    # ---- per-group scaled affinity, stacked to (G*N, N) ----------------------------
    scale = 1.0 / math.sqrt(float(DG[1]))
    wmn_parts = []
    for g in range(G):
        qg = wq[:, g * DG[0]:(g + 1) * DG[0]]                         # (N, dg0)
        kg = wk[:, g * DG[1]:(g + 1) * DG[1]]                         # (N, dg1)
        aff = lax.dot_general(qg, kg, (((1,), (1,)), ((), ())),
                              preferred_element_type=jnp.float32)     # (N, N)
        wmn_parts.append(lg[:, g * N:(g + 1) * N] + scale * aff)
    wmn = jnp.concatenate(wmn_parts, axis=0)                          # (G*N, N)

    # ---- top-k masked softmax, vectorized across all groups at once ----------------
    # torch.topk + softmax + scatter == masked softmax over the k largest entries
    # of each row (exact for distinct scores).
    cur = wmn
    th = row_max = None
    for t in range(TOPK):
        th = jnp.max(cur, axis=-1, keepdims=True)
        if t == 0:
            row_max = th
        cur = jnp.where(cur >= th, -jnp.inf, cur)
    keep = wmn >= th
    p = jnp.where(keep, jnp.exp(wmn - row_max), 0.0)
    w_att = p / jnp.sum(p, axis=-1, keepdims=True)                    # (G*N, N)

    # ---- attention bmm (all groups in one matmul) + grouped 1x1 conv ---------------
    att = jnp.dot(w_att, f, preferred_element_type=jnp.float32)       # (G*N, FEAT)
    conv_w = conv_w_ref[...]                                          # (DIM2, FEAT)
    outs = []
    for g in range(G):
        a_g = att[g * N:(g + 1) * N, :]                               # (N, FEAT)
        c_g = conv_w[g * DG[2]:(g + 1) * DG[2], :]                    # (DG2, FEAT)
        outs.append(lax.dot_general(a_g, c_g, (((1,), (1,)), ((), ())),
                                    preferred_element_type=jnp.float32))
    out_ref[...] = jnp.concatenate(outs, axis=1) + conv_b_ref[...]    # (N, DIM2)


# --------------------------------- parameters ---------------------------------------
def init_params(key):
    ks = jax.random.split(key, 8)
    s = 0.1
    return {
        'wg_w': s * jax.random.normal(ks[0], (4, GEO, G), jnp.float32),
        'wg_b': s * jax.random.normal(ks[1], (4, G), jnp.float32),
        'wk_w': s * jax.random.normal(ks[2], (4, FEAT, DIM[1]), jnp.float32),
        'wk_b': s * jax.random.normal(ks[3], (4, DIM[1]), jnp.float32),
        'wq_w': s * jax.random.normal(ks[4], (4, FEAT, DIM[0]), jnp.float32),
        'wq_b': s * jax.random.normal(ks[5], (4, DIM[0]), jnp.float32),
        # Conv2d(G*FEAT -> DIM2, kernel 1, groups=G): (out_ch, in_per_group)
        'conv_w': s * jax.random.normal(ks[6], (DIM[2], FEAT), jnp.float32),
        'conv_b': s * jax.random.normal(ks[7], (DIM[2],), jnp.float32),
    }


def prepare_params(params):
    """One-time repacking of the module parameters into kernel-friendly layouts
    (done outside the per-call path).  Only the diagonal class pairs (idx 0, 3)
    are kept, because the cross-class relation blocks are zeroed by the module."""
    diag = jnp.array([c * NB_CLS + c for c in range(NB_CLS)])          # [0, 3]
    wg_w = params['wg_w'][diag]                                        # (2, GEO, G)
    wg_b = params['wg_b'][diag]                                        # (2, G)
    wk_w = params['wk_w'][diag]
    wk_b = params['wk_b'][diag]
    wq_w = params['wq_w'][diag]
    wq_b = params['wq_b'][diag]

    # Block weight for WG: Wbig[c, j*GEO+d, g*N+j'] = wg_w[c, d, g] * (j == j')
    eye = jnp.eye(N, dtype=jnp.float32)
    wbig = jnp.einsum('cdg,jk->cjdgk', wg_w, eye).reshape(NB_CLS, N * GEO, G * N)
    # Bias broadcast to the (g*N + j) column layout.
    wgb_row = jnp.repeat(wg_b, N, axis=1).reshape(NB_CLS, 1, G * N)

    wkq_w = jnp.concatenate([wk_w, wq_w], axis=-1)                     # (2, FEAT, 64)
    wkq_b = jnp.concatenate([wk_b, wq_b], axis=-1).reshape(NB_CLS, 1, DIM[1] + DIM[0])

    return {
        'wbig': wbig,
        'wgb': wgb_row,
        'wkq_w': wkq_w,
        'wkq_b': wkq_b,
        'conv_w': params['conv_w'],                                    # (DIM2, FEAT)
        'conv_b': params['conv_b'].reshape(1, DIM[2]),
    }


# --------------------------------- forward wrapper ----------------------------------
@jax.jit
def cls_wise_relation_forward(f_a, pos_emb, prep):
    n, c, feat = f_a.shape                                             # (N, 2, FEAT)
    f_cls = jnp.transpose(f_a, (1, 0, 2))                              # (2, N, FEAT)
    # Free row-major merge: pe2d[m, n*GEO + d] = pos_emb[0, m, n, d]; the diagonal
    # block for class i is then the (N, N*GEO) tile at block index (i, i).
    pe2d = pos_emb.reshape(c * n, c * n * GEO)                         # (2N, 2N*GEO)

    out = pl.pallas_call(
        fused_relation_kernel,
        out_shape=jax.ShapeDtypeStruct((NB_CLS, N, DIM[2]), jnp.float32),
        grid=(NB_CLS,),
        in_specs=[
            pl.BlockSpec((N, N * GEO), lambda i: (i, i)),                       # pe
            pl.BlockSpec((None, N, FEAT), lambda i: (i, 0, 0)),                 # f_cls
            pl.BlockSpec((None, N * GEO, G * N), lambda i: (i, 0, 0)),          # wbig
            pl.BlockSpec((None, 1, G * N), lambda i: (i, 0, 0)),                # wg bias
            pl.BlockSpec((None, FEAT, DIM[1] + DIM[0]), lambda i: (i, 0, 0)),   # WK|WQ
            pl.BlockSpec((None, 1, DIM[1] + DIM[0]), lambda i: (i, 0, 0)),      # bias
            pl.BlockSpec((DIM[2], FEAT), lambda i: (0, 0)),                     # conv w
            pl.BlockSpec((1, DIM[2]), lambda i: (0, 0)),                        # conv b
        ],
        out_specs=pl.BlockSpec((None, N, DIM[2]), lambda i: (i, 0, 0)),
        compiler_params=pltpu.CompilerParams(dimension_semantics=("parallel",)),
    )(pe2d, f_cls, prep['wbig'], prep['wgb'], prep['wkq_w'], prep['wkq_b'],
      prep['conv_w'], prep['conv_b'])

    # (cls, n, dim2) -> (n, cls, dim2)  == module output (N, nb_cls, dim2)
    return jnp.transpose(out, (1, 0, 2))


# ----------------------------- pure-JAX reference -----------------------------------
def reference_forward(f_a, pos_emb, params):
    n, c, feat = f_a.shape
    fa_p = jnp.transpose(f_a, (1, 0, 2))
    f0, f1 = fa_p[0], fa_p[1]
    hp = lax.Precision.HIGHEST

    def rel_op(fk, fq, peb, idx):
        pe2 = peb.reshape(-1, GEO)
        wg = jax.nn.relu(jnp.dot(pe2, params['wg_w'][idx], precision=hp) + params['wg_b'][idx])
        wk = jnp.dot(fk, params['wk_w'][idx], precision=hp) + params['wk_b'][idx]
        wq = jnp.dot(fq, params['wq_w'][idx], precision=hp) + params['wq_b'][idx]
        wk = wk.reshape(1, n, G, DG[1]).transpose(0, 2, 3, 1).reshape(-1, DG[1], n)
        wq = wq.reshape(1, n, G, DG[0]).transpose(0, 2, 1, 3).reshape(-1, n, DG[0])
        aff = (1.0 / math.sqrt(float(DG[1]))) * jnp.einsum('gnd,gdm->gnm', wq, wk, precision=hp)
        wg = wg.reshape(1, n, n, G).transpose(0, 3, 1, 2).reshape(-1, n, n)
        wmn = jnp.log(jnp.maximum(wg, 1e-6)) + aff
        vals, inds = lax.top_k(wmn, TOPK)
        sm = jax.nn.softmax(vals, axis=-1)
        gi = jnp.arange(G)[:, None, None]
        ni = jnp.arange(n)[None, :, None]
        return jnp.zeros_like(wmn).at[gi, ni, inds].set(sm)

    w11 = rel_op(f0, f0, pos_emb[:, :n, :n, :], 0)
    w12 = rel_op(f0, f1, pos_emb[:, :n, n:, :], 1)
    w21 = rel_op(f1, f0, pos_emb[:, n:, :n, :], 2)
    w22 = rel_op(f1, f1, pos_emb[:, n:, n:, :], 3)
    sub1 = jnp.concatenate([w11, w12], axis=2)
    sub2 = jnp.concatenate([w21, w22], axis=2)
    wmn = jnp.concatenate([sub1, sub2], axis=1)                 # (G, 2N, 2N)
    wmn = wmn.at[:, n:, :n].set(0.0).at[:, :n, n:].set(0.0)
    wmn = wmn.reshape(1, -1, n * c)
    fa_flat = fa_p.reshape(1, n * c, feat)
    out = jnp.matmul(wmn, fa_flat, precision=hp)                # (1, G*2N, feat)
    out = out.reshape(G, c, n, feat).transpose(0, 3, 2, 1)      # (G, feat, N, 2)
    W = params['conv_w'].reshape(G, DG[2], feat)
    y = jnp.einsum('gfnc,gof->gonc', out, W, precision=hp) + params['conv_b'].reshape(G, DG[2], 1, 1)
    y = y.reshape(DIM[2], n, c)
    return jnp.transpose(y, (1, 2, 0))                          # (N, 2, DIM2)


# ------------------------------------- main ------------------------------------------
if __name__ == "__main__":
    key = jax.random.PRNGKey(0)
    kp, kf, kpe = jax.random.split(key, 3)
    params = init_params(kp)
    f_a = jax.random.normal(kf, (N, NB_CLS, FEAT), jnp.float32)
    pos_emb = jax.random.uniform(kpe, (1, NB_CLS * N, NB_CLS * N, GEO), jnp.float32)

    # Round test data to bf16-representable f32 so any MXU bf16 input truncation is
    # exact: kernel and HIGHEST-precision reference then agree to ~f32 roundoff and
    # the top-k selection cannot flip at a precision-induced boundary.
    to_rep = lambda x: x.astype(jnp.bfloat16).astype(jnp.float32)
    params = jax.tree_util.tree_map(to_rep, params)
    f_a, pos_emb = to_rep(f_a), to_rep(pos_emb)

    prep = prepare_params(params)                 # one-time weight repacking
    out = cls_wise_relation_forward(f_a, pos_emb, prep)
    out = jax.block_until_ready(out)

    assert out.shape == (N, NB_CLS, DIM[2]), out.shape
    ref = reference_forward(f_a, pos_emb, params)
    # TODO(synk): torch.topk breaks exact ties by index; the masked-softmax top-k here
    # keeps all tied entries (identical for distinct/continuous scores as used here).
    np.testing.assert_allclose(np.asarray(out), np.asarray(ref), rtol=1e-2, atol=1e-2)
    print("KERNEL_OK")
</pallas_src>

<mosaic_0001>
module attributes {stable_mosaic.version = 11 : i64} {
  func.func @fused_relation_kernel(%arg0: i32, %arg1: memref<8x128xf32, #tpu.memory_space<vmem>>, %arg2: memref<1x8x32xf32, #tpu.memory_space<vmem>>, %arg3: memref<1x128x32xf32, #tpu.memory_space<vmem>>, %arg4: memref<1x1x32xf32, #tpu.memory_space<vmem>>, %arg5: memref<1x32x64xf32, #tpu.memory_space<vmem>>, %arg6: memref<1x1x64xf32, #tpu.memory_space<vmem>>, %arg7: memref<32x32xf32, #tpu.memory_space<vmem>>, %arg8: memref<1x32xf32, #tpu.memory_space<vmem>>, %arg9: memref<1x8x32xf32, #tpu.memory_space<vmem>>) attributes {dimension_semantics = [#tpu.dimension_semantics<parallel>], iteration_bounds = array<i64: 2>, scalar_prefetch = 0 : i64, scratch_operands = 0 : i64, tpu.core_type = #tpu.core_type<tc>, window_params = [{transform_indices = @transform_0, window_bounds = array<i64: 8, 128>}, {transform_indices = @transform_1, window_bounds = array<i64: 1, 8, 32>}, {transform_indices = @transform_2, window_bounds = array<i64: 1, 128, 32>}, {transform_indices = @transform_3, window_bounds = array<i64: 1, 1, 32>}, {transform_indices = @transform_4, window_bounds = array<i64: 1, 32, 64>}, {transform_indices = @transform_5, window_bounds = array<i64: 1, 1, 64>}, {pipeline_mode = #tpu.pipeline_mode<synchronous>, transform_indices = @transform_6, window_bounds = array<i64: 32, 32>}, {pipeline_mode = #tpu.pipeline_mode<synchronous>, transform_indices = @transform_7, window_bounds = array<i64: 1, 32>}, {transform_indices = @transform_8, window_bounds = array<i64: 1, 8, 32>}]} {
    %c0 = arith.constant 0 : index
    %c0_0 = arith.constant 0 : index
    %c0_1 = arith.constant 0 : index
    %0 = vector.load %arg2[%c0, %c0_0, %c0_1] : memref<1x8x32xf32, #tpu.memory_space<vmem>>, vector<1x8x32xf32>
    %1 = vector.shape_cast %0 : vector<1x8x32xf32> to vector<8x32xf32>
    %c0_2 = arith.constant 0 : index
    %c0_3 = arith.constant 0 : index
    %2 = vector.load %arg1[%c0_2, %c0_3] : memref<8x128xf32, #tpu.memory_space<vmem>>, vector<8x128xf32>
    %c0_4 = arith.constant 0 : index
    %c0_5 = arith.constant 0 : index
    %c0_6 = arith.constant 0 : index
    %3 = vector.load %arg3[%c0_4, %c0_5, %c0_6] : memref<1x128x32xf32, #tpu.memory_space<vmem>>, vector<1x128x32xf32>
    %4 = vector.shape_cast %3 : vector<1x128x32xf32> to vector<128x32xf32>
    %cst = arith.constant dense<0.000000e+00> : vector<8x32xf32>
    %5 = tpu.matmul %2, %4, %cst {dimension_numbers = #tpu.dot_dimension_numbers<[1], [0], [0], [1], [0, 0, 1, 1], [], []>} : vector<8x128xf32>, vector<128x32xf32>, vector<8x32xf32> -> vector<8x32xf32>
    %c0_7 = arith.constant 0 : index
    %c0_8 = arith.constant 0 : index
    %c0_9 = arith.constant 0 : index
    %6 = vector.load %arg4[%c0_7, %c0_8, %c0_9] : memref<1x1x32xf32, #tpu.memory_space<vmem>>, vector<1x1x32xf32>
    %7 = vector.shape_cast %6 : vector<1x1x32xf32> to vector<1x32xf32>
    %8 = vector.broadcast %7 : vector<1x32xf32> to vector<8x32xf32>
    %9 = arith.addf %5, %8 : vector<8x32xf32>
    %cst_10 = arith.constant 0.000000e+00 : f32
    %10 = vector.broadcast %cst_10 : f32 to vector<8x32xf32>
    %11 = arith.maximumf %9, %10 : vector<8x32xf32>
    %cst_11 = arith.constant 9.99999997E-7 : f32
    %12 = vector.broadcast %cst_11 : f32 to vector<8x32xf32>
    %13 = arith.maximumf %11, %12 : vector<8x32xf32>
    %14 = math.log %13 : vector<8x32xf32>
    %c0_12 = arith.constant 0 : index
    %c0_13 = arith.constant 0 : index
    %c0_14 = arith.constant 0 : index
    %15 = vector.load %arg5[%c0_12, %c0_13, %c0_14] : memref<1x32x64xf32, #tpu.memory_space<vmem>>, vector<1x32x64xf32>
    %16 = vector.shape_cast %15 : vector<1x32x64xf32> to vector<32x64xf32>
    %cst_15 = arith.constant dense<0.000000e+00> : vector<8x64xf32>
    %17 = tpu.matmul %1, %16, %cst_15 {dimension_numbers = #tpu.dot_dimension_numbers<[1], [0], [0], [1], [0, 0, 1, 1], [], []>} : vector<8x32xf32>, vector<32x64xf32>, vector<8x64xf32> -> vector<8x64xf32>
    %c0_16 = arith.constant 0 : index
    %c0_17 = arith.constant 0 : index
    %c0_18 = arith.constant 0 : index
    %18 = vector.load %arg6[%c0_16, %c0_17, %c0_18] : memref<1x1x64xf32, #tpu.memory_space<vmem>>, vector<1x1x64xf32>
    %19 = vector.shape_cast %18 : vector<1x1x64xf32> to vector<1x64xf32>
    %20 = vector.broadcast %19 : vector<1x64xf32> to vector<8x64xf32>
    %21 = arith.addf %17, %20 : vector<8x64xf32>
    %22 = vector.extract_strided_slice %21 {offsets = [0, 0], sizes = [8, 32], strides = [1, 1]} : vector<8x64xf32> to vector<8x32xf32>
    %23 = vector.extract_strided_slice %21 {offsets = [0, 32], sizes = [8, 32], strides = [1, 1]} : vector<8x64xf32> to vector<8x32xf32>
    %24 = vector.extract_strided_slice %23 {offsets = [0, 0], sizes = [8, 8], strides = [1, 1]} : vector<8x32xf32> to vector<8x8xf32>
    %25 = vector.extract_strided_slice %22 {offsets = [0, 0], sizes = [8, 8], strides = [1, 1]} : vector<8x32xf32> to vector<8x8xf32>
    %cst_19 = arith.constant dense<0.000000e+00> : vector<8x8xf32>
    %26 = tpu.matmul %24, %25, %cst_19 {dimension_numbers = #tpu.dot_dimension_numbers<[1], [1], [0], [0], [0, 0, 1, 0], [], []>} : vector<8x8xf32>, vector<8x8xf32>, vector<8x8xf32> -> vector<8x8xf32>
    %27 = vector.extract_strided_slice %14 {offsets = [0, 0], sizes = [8, 8], strides = [1, 1]} : vector<8x32xf32> to vector<8x8xf32>
    %cst_20 = arith.constant 0.353553385 : f32
    %28 = vector.broadcast %cst_20 : f32 to vector<8x8xf32>
    %29 = arith.mulf %28, %26 : vector<8x8xf32>
    %30 = arith.addf %27, %29 : vector<8x8xf32>
    %31 = vector.extract_strided_slice %23 {offsets = [0, 8], sizes = [8, 8], strides = [1, 1]} : vector<8x32xf32> to vector<8x8xf32>
    %32 = vector.extract_strided_slice %22 {offsets = [0, 8], sizes = [8, 8], strides = [1, 1]} : vector<8x32xf32> to vector<8x8xf32>
    %cst_21 = arith.constant dense<0.000000e+00> : vector<8x8xf32>
    %33 = tpu.matmul %31, %32, %cst_21 {dimension_numbers = #tpu.dot_dimension_numbers<[1], [1], [0], [0], [0, 0, 1, 0], [], []>} : vector<8x8xf32>, vector<8x8xf32>, vector<8x8xf32> -> vector<8x8xf32>
    %34 = vector.extract_strided_slice %14 {offsets = [0, 8], sizes = [8, 8], strides = [1, 1]} : vector<8x32xf32> to vector<8x8xf32>
    %cst_22 = arith.constant 0.353553385 : f32
    %35 = vector.broadcast %cst_22 : f32 to vector<8x8xf32>
    %36 = arith.mulf %35, %33 : vector<8x8xf32>
    %37 = arith.addf %34, %36 : vector<8x8xf32>
    %38 = vector.extract_strided_slice %23 {offsets = [0, 16], sizes = [8, 8], strides = [1, 1]} : vector<8x32xf32> to vector<8x8xf32>
    %39 = vector.extract_strided_slice %22 {offsets = [0, 16], sizes = [8, 8], strides = [1, 1]} : vector<8x32xf32> to vector<8x8xf32>
    %cst_23 = arith.constant dense<0.000000e+00> : vector<8x8xf32>
    %40 = tpu.matmul %38, %39, %cst_23 {dimension_numbers = #tpu.dot_dimension_numbers<[1], [1], [0], [0], [0, 0, 1, 0], [], []>} : vector<8x8xf32>, vector<8x8xf32>, vector<8x8xf32> -> vector<8x8xf32>
    %41 = vector.extract_strided_slice %14 {offsets = [0, 16], sizes = [8, 8], strides = [1, 1]} : vector<8x32xf32> to vector<8x8xf32>
    %cst_24 = arith.constant 0.353553385 : f32
    %42 = vector.broadcast %cst_24 : f32 to vector<8x8xf32>
    %43 = arith.mulf %42, %40 : vector<8x8xf32>
    %44 = arith.addf %41, %43 : vector<8x8xf32>
    %45 = vector.extract_strided_slice %23 {offsets = [0, 24], sizes = [8, 8], strides = [1, 1]} : vector<8x32xf32> to vector<8x8xf32>
    %46 = vector.extract_strided_slice %22 {offsets = [0, 24], sizes = [8, 8], strides = [1, 1]} : vector<8x32xf32> to vector<8x8xf32>
    %cst_25 = arith.constant dense<0.000000e+00> : vector<8x8xf32>
    %47 = tpu.matmul %45, %46, %cst_25 {dimension_numbers = #tpu.dot_dimension_numbers<[1], [1], [0], [0], [0, 0, 1, 0], [], []>} : vector<8x8xf32>, vector<8x8xf32>, vector<8x8xf32> -> vector<8x8xf32>
    %48 = vector.extract_strided_slice %14 {offsets = [0, 24], sizes = [8, 8], strides = [1, 1]} : vector<8x32xf32> to vector<8x8xf32>
    %cst_26 = arith.constant 0.353553385 : f32
    %49 = vector.broadcast %cst_26 : f32 to vector<8x8xf32>
    %50 = arith.mulf %49, %47 : vector<8x8xf32>
    %51 = arith.addf %48, %50 : vector<8x8xf32>
    %52 = tpu.concatenate %30, %37, %44, %51 in 0 : vector<8x8xf32>, vector<8x8xf32>, vector<8x8xf32>, vector<8x8xf32> -> vector<32x8xf32>
    %cst_27 = arith.constant dense<0xFF800000> : vector<32xf32>
    %53 = vector.multi_reduction <maximumf>, %52, %cst_27 [1] : vector<32x8xf32> to vector<32xf32>
    %54 = vector.shape_cast %53 : vector<32xf32> to vector<32x1xf32>
    %55 = vector.broadcast %54 : vector<32x1xf32> to vector<32x8xf32>
    %56 = arith.cmpf oge, %52, %55 : vector<32x8xf32>
    %cst_28 = arith.constant 0xFF800000 : f32
    %57 = vector.broadcast %cst_28 : f32 to vector<32x8xf32>
    %58 = arith.select %56, %57, %52 : vector<32x8xi1>, vector<32x8xf32>
    %cst_29 = arith.constant dense<0xFF800000> : vector<32xf32>
    %59 = vector.multi_reduction <maximumf>, %58, %cst_29 [1] : vector<32x8xf32> to vector<32xf32>
    %60 = vector.shape_cast %59 : vector<32xf32> to vector<32x1xf32>
    %61 = vector.broadcast %60 : vector<32x1xf32> to vector<32x8xf32>
    %62 = arith.cmpf oge, %58, %61 : vector<32x8xf32>
    %cst_30 = arith.constant 0xFF800000 : f32
    %63 = vector.broadcast %cst_30 : f32 to vector<32x8xf32>
    %64 = arith.select %62, %63, %58 : vector<32x8xi1>, vector<32x8xf32>
    %cst_31 = arith.constant dense<0xFF800000> : vector<32xf32>
    %65 = vector.multi_reduction <maximumf>, %64, %cst_31 [1] : vector<32x8xf32> to vector<32xf32>
    %66 = vector.shape_cast %65 : vector<32xf32> to vector<32x1xf32>
    %67 = vector.broadcast %66 : vector<32x1xf32> to vector<32x8xf32>
    %68 = arith.cmpf oge, %64, %67 : vector<32x8xf32>
    %cst_32 = arith.constant 0xFF800000 : f32
    %69 = vector.broadcast %cst_32 : f32 to vector<32x8xf32>
    %70 = arith.select %68, %69, %64 : vector<32x8xi1>, vector<32x8xf32>
    %cst_33 = arith.constant dense<0xFF800000> : vector<32xf32>
    %71 = vector.multi_reduction <maximumf>, %70, %cst_33 [1] : vector<32x8xf32> to vector<32xf32>
    %72 = vector.shape_cast %71 : vector<32xf32> to vector<32x1xf32>
    %73 = vector.broadcast %72 : vector<32x1xf32> to vector<32x8xf32>
    %74 = arith.cmpf oge, %52, %73 : vector<32x8xf32>
    %75 = vector.broadcast %54 : vector<32x1xf32> to vector<32x8xf32>
    %76 = arith.subf %52, %75 : vector<32x8xf32>
    %77 = math.exp %76 : vector<32x8xf32>
    %cst_34 = arith.constant 0.000000e+00 : f32
    %78 = vector.broadcast %cst_34 : f32 to vector<32x8xf32>
    %79 = arith.select %74, %77, %78 : vector<32x8xi1>, vector<32x8xf32>
    %cst_35 = arith.constant dense<0.000000e+00> : vector<32xf32>
    %80 = vector.multi_reduction <add>, %79, %cst_35 [1] : vector<32x8xf32> to vector<32xf32>
    %81 = vector.shape_cast %80 : vector<32xf32> to vector<32x1xf32>
    %82 = vector.broadcast %81 : vector<32x1xf32> to vector<32x8xf32>
    %83 = arith.divf %79, %82 : vector<32x8xf32>
    %cst_36 = arith.constant dense<0.000000e+00> : vector<32x32xf32>
    %84 = tpu.matmul %83, %1, %cst_36 {dimension_numbers = #tpu.dot_dimension_numbers<[1], [0], [0], [1], [0, 0, 1, 1], [], []>} : vector<32x8xf32>, vector<8x32xf32>, vector<32x32xf32> -> vector<32x32xf32>
    %c0_37 = arith.constant 0 : index
    %c0_38 = arith.constant 0 : index
    %85 = vector.load %arg7[%c0_37, %c0_38] : memref<32x32xf32, #tpu.memory_space<vmem>>, vector<32x32xf32>
    %86 = vector.extract_strided_slice %84 {offsets = [0, 0], sizes = [8, 32], strides = [1, 1]} : vector<32x32xf32> to vector<8x32xf32>
    %87 = vector.extract_strided_slice %85 {offsets = [0, 0], sizes = [8, 32], strides = [1, 1]} : vector<32x32xf32> to vector<8x32xf32>
    %cst_39 = arith.constant dense<0.000000e+00> : vector<8x8xf32>
    %88 = tpu.matmul %86, %87, %cst_39 {dimension_numbers = #tpu.dot_dimension_numbers<[1], [1], [0], [0], [0, 0, 1, 0], [], []>} : vector<8x32xf32>, vector<8x32xf32>, vector<8x8xf32> -> vector<8x8xf32>
    %89 = vector.extract_strided_slice %84 {offsets = [8, 0], sizes = [8, 32], strides = [1, 1]} : vector<32x32xf32> to vector<8x32xf32>
    %90 = vector.extract_strided_slice %85 {offsets = [8, 0], sizes = [8, 32], strides = [1, 1]} : vector<32x32xf32> to vector<8x32xf32>
    %cst_40 = arith.constant dense<0.000000e+00> : vector<8x8xf32>
    %91 = tpu.matmul %89, %90, %cst_40 {dimension_numbers = #tpu.dot_dimension_numbers<[1], [1], [0], [0], [0, 0, 1, 0], [], []>} : vector<8x32xf32>, vector<8x32xf32>, vector<8x8xf32> -> vector<8x8xf32>
    %92 = vector.extract_strided_slice %84 {offsets = [16, 0], sizes = [8, 32], strides = [1, 1]} : vector<32x32xf32> to vector<8x32xf32>
    %93 = vector.extract_strided_slice %85 {offsets = [16, 0], sizes = [8, 32], strides = [1, 1]} : vector<32x32xf32> to vector<8x32xf32>
    %cst_41 = arith.constant dense<0.000000e+00> : vector<8x8xf32>
    %94 = tpu.matmul %92, %93, %cst_41 {dimension_numbers = #tpu.dot_dimension_numbers<[1], [1], [0], [0], [0, 0, 1, 0], [], []>} : vector<8x32xf32>, vector<8x32xf32>, vector<8x8xf32> -> vector<8x8xf32>
    %95 = vector.extract_strided_slice %84 {offsets = [24, 0], sizes = [8, 32], strides = [1, 1]} : vector<32x32xf32> to vector<8x32xf32>
    %96 = vector.extract_strided_slice %85 {offsets = [24, 0], sizes = [8, 32], strides = [1, 1]} : vector<32x32xf32> to vector<8x32xf32>
    %cst_42 = arith.constant dense<0.000000e+00> : vector<8x8xf32>
    %97 = tpu.matmul %95, %96, %cst_42 {dimension_numbers = #tpu.dot_dimension_numbers<[1], [1], [0], [0], [0, 0, 1, 0], [], []>} : vector<8x32xf32>, vector<8x32xf32>, vector<8x8xf32> -> vector<8x8xf32>
    %98 = tpu.concatenate %88, %91, %94, %97 in 1 : vector<8x8xf32>, vector<8x8xf32>, vector<8x8xf32>, vector<8x8xf32> -> vector<8x32xf32>
    %c0_43 = arith.constant 0 : index
    %c0_44 = arith.constant 0 : index
    %99 = vector.load %arg8[%c0_43, %c0_44] : memref<1x32xf32, #tpu.memory_space<vmem>>, vector<1x32xf32>
    %100 = vector.broadcast %99 : vector<1x32xf32> to vector<8x32xf32>
    %101 = arith.addf %98, %100 : vector<8x32xf32>
    %c0_45 = arith.constant 0 : index
    %c0_46 = arith.constant 0 : index
    %c0_47 = arith.constant 0 : index
    %102 = vector.load %arg9[%c0_45, %c0_46, %c0_47] : memref<1x8x32xf32, #tpu.memory_space<vmem>>, vector<1x8x32xf32>
    %103 = vector.shape_cast %102 : vector<1x8x32xf32> to vector<8x32xf32>
    %104 = vector.shape_cast %101 : vector<8x32xf32> to vector<1x8x32xf32>
    tpu.vector_store %arg9[%c0_45, %c0_46, %c0_47], %104 {strides = array<i32>} : memref<1x8x32xf32, #tpu.memory_space<vmem>>, vector<1x8x32xf32>,
    return
  }
  func.func @transform_0(%arg0: i32) -> (i32, i32) {
    %c0_i32 = arith.constant 0 : i32
    return %arg0, %arg0 : i32, i32
  }
  func.func @transform_1(%arg0: i32) -> (i32, i32, i32) {
    %c0_i32 = arith.constant 0 : i32
    %c0_i32_0 = arith.constant 0 : i32
    %c0_i32_1 = arith.constant 0 : i32
    return %arg0, %c0_i32, %c0_i32_0 : i32, i32, i32
  }
  func.func @transform_2(%arg0: i32) -> (i32, i32, i32) {
    %c0_i32 = arith.constant 0 : i32
    %c0_i32_0 = arith.constant 0 : i32
    %c0_i32_1 = arith.constant 0 : i32
    return %arg0, %c0_i32, %c0_i32_0 : i32, i32, i32
  }
  func.func @transform_3(%arg0: i32) -> (i32, i32, i32) {
    %c0_i32 = arith.constant 0 : i32
    %c0_i32_0 = arith.constant 0 : i32
    %c0_i32_1 = arith.constant 0 : i32
    return %arg0, %c0_i32, %c0_i32_0 : i32, i32, i32
  }
  func.func @transform_4(%arg0: i32) -> (i32, i32, i32) {
    %c0_i32 = arith.constant 0 : i32
    %c0_i32_0 = arith.constant 0 : i32
    %c0_i32_1 = arith.constant 0 : i32
    return %arg0, %c0_i32, %c0_i32_0 : i32, i32, i32
  }
  func.func @transform_5(%arg0: i32) -> (i32, i32, i32) {
    %c0_i32 = arith.constant 0 : i32
    %c0_i32_0 = arith.constant 0 : i32
    %c0_i32_1 = arith.constant 0 : i32
    return %arg0, %c0_i32, %c0_i32_0 : i32, i32, i32
  }
  func.func @transform_6(%arg0: i32) -> (i32, i32) {
    %c0_i32 = arith.constant 0 : i32
    %c0_i32_0 = arith.constant 0 : i32
    %c0_i32_1 = arith.constant 0 : i32
    return %c0_i32, %c0_i32_0 : i32, i32
  }
  func.func @transform_7(%arg0: i32) -> (i32, i32) {
    %c0_i32 = arith.constant 0 : i32
    %c0_i32_0 = arith.constant 0 : i32
    %c0_i32_1 = arith.constant 0 : i32
    return %c0_i32, %c0_i32_0 : i32, i32
  }
  func.func @transform_8(%arg0: i32) -> (i32, i32, i32) {
    %c0_i32 = arith.constant 0 : i32
    %c0_i32_0 = arith.constant 0 : i32
    %c0_i32_1 = arith.constant 0 : i32
    return %arg0, %c0_i32, %c0_i32_0 : i32, i32, i32
  }
}

</mosaic_0001>

<llo_original>
// kernel: cls_wise_relation_forward.1
$region0: #{cls_wise_relation_forward.1}
  #allocation0 [shape = 'u32[]', space=smem, size = 0x4, offset = 0x4, fixed_abs, tag = 'smem constant byte address 0x4 - core index']
  #allocation1 [shape = 'u32[144,128]{1,0:T(1,128)}', space=vmem, size = 0x12000, scoped, tag = 'internal scratch']
  %s0 = inlined_call_operand.vmem [shape: f32[16,256], index: 0, kind: input, shape index: {}]
  %s1 = inlined_call_operand.vmem [shape: f32[2,8,32], index: 1, kind: input, shape index: {}]
  %s2 = inlined_call_operand.vmem [shape: f32[2,128,32], index: 2, kind: input, shape index: {}]
  %s3 = inlined_call_operand.vmem [shape: f32[2,1,32], index: 3, kind: input, shape index: {}]
  %s4 = inlined_call_operand.vmem [shape: f32[2,32,64], index: 4, kind: input, shape index: {}]
  %s5 = inlined_call_operand.vmem [shape: f32[2,1,64], index: 5, kind: input, shape index: {}]
  %s6 = inlined_call_operand.vmem [shape: f32[32,32], index: 6, kind: input, shape index: {}]
  %s7 = inlined_call_operand.vmem [shape: f32[1,32], index: 7, kind: input, shape index: {}]
  %s8 = inlined_call_operand.vmem [shape: f32[2,8,32], index: 8, kind: output, shape index: {}]
  %s9 = sld [smem:[#allocation0]]
  $region65: #{cls_wise_relation_forward.1} parent=0
    _
  %s11 = ssub.s32 1, %s9
  %s12 = scalar_select 0, %s11, %s9
  loop: start=0, step=1, limit=4
  $region2: #{cls_wise_relation_forward.1} parent=0 // loop_pre_header
    _
  $region3: #{cls_wise_relation_forward.1} parent=0 // loop_header
    %s14 = sphi 0, %s18
    %p15 = scmp.ge.s32.totalorder %s14, 4
    %s26 = sphi 0, %s28
    %s29 = sphi 0, %s26
    %s30 = sphi 0, %s29
    %s46 = sphi 0, %s30
    %s52 = sphi 0, %s54
    %s55 = sphi 0, %s52
    %s56 = sphi 0, %s55
    %s72 = sphi 0, %s56
    %s78 = sphi 0, %s80
    %s81 = sphi 0, %s78
    %s82 = sphi 0, %s81
    %s98 = sphi 0, %s82
    %s104 = sphi 0, %s106
    %s107 = sphi 0, %s104
    %s108 = sphi 0, %s107
    %s124 = sphi 0, %s108
    %s130 = sphi 0, %s132
    %s133 = sphi 0, %s130
    %s134 = sphi 0, %s133
    %s150 = sphi 0, %s134
    %s156 = sphi 0, %s158
    %s159 = sphi 0, %s156
    %s160 = sphi 0, %s159
    %s176 = sphi 0, %s160
    %s180 = sphi 0, %s180
    %s182 = sphi 0, %s180
    %s183 = sphi 0, %s182
    %s197 = sphi 0, %s183
    %s201 = sphi 0, %s201
    %s203 = sphi 0, %s201
    %s204 = sphi 0, %s203
    %s218 = sphi 0, %s204
    %s224 = sphi 0, %s226
    %s227 = sphi 0, %s224
    %s228 = sphi 0, %s227
    %s244 = sphi 0, %s228
  $region4: #{cls_wise_relation_forward.1} parent=0 // loop_header_branch
    %17 = sbr.rel (%p15) target = $region8
  $region5: #{cls_wise_relation_forward.1} parent=0 // loop_body
    %s19 = ssub.s32 %s14, 1
    %s20 = ssub.s32 %s14, 2
    %s21 = sadd.s32 %s14, 1
    %s22 = ssub.s32 %s14, %s21
    %s23 = ssub.s32 %s14, %s21
    %s24 = sor.u32 %s22, %s23
    %p25 = scmp.eq.s32.totalorder %s24, 0
    %s27 = sadd.s32 %s26, 1
    %s28 = scalar_select %p25, %s26, %s27
    %p31 = pneg %p25
    %p32 = scmp.eq.s32.totalorder %s14, 1
    %p33 = por %p31, %p32
    %p34 = scmp.ne.s32.totalorder %s26, %s29
    %p35 = scmp.eq.s32.totalorder %s14, 0
    %p36 = por %p34, %p35
    %p37 = scmp.ne.s32.totalorder %s26, %s29
    %p38 = scmp.eq.s32.totalorder %s19, 1
    %p39 = por %p37, %p38
    %p40 = scmp.ne.s32.totalorder %s29, %s30
    %p41 = scmp.eq.s32.totalorder %s19, 0
    %p42 = por %p40, %p41
    %p43 = scmp.ne.s32.totalorder %s29, %s30
    %p44 = scmp.eq.s32.totalorder %s20, 1
    %p45 = por %p43, %p44
    %p47 = scmp.ne.s32.totalorder %s30, %s46
    %p48 = scmp.eq.s32.totalorder %s20, 0
    %p49 = por %p47, %p48
    %s50 = ssub.s32 %s14, %s21
    %p51 = scmp.eq.s32.totalorder %s50, 0
    %s53 = sadd.s32 %s52, 1
    %s54 = scalar_select %p51, %s52, %s53
    %p57 = pneg %p51
    %p58 = scmp.eq.s32.totalorder %s14, 1
    %p59 = por %p57, %p58
    %p60 = scmp.ne.s32.totalorder %s52, %s55
    %p61 = scmp.eq.s32.totalorder %s14, 0
    %p62 = por %p60, %p61
    %p63 = scmp.ne.s32.totalorder %s52, %s55
    %p64 = scmp.eq.s32.totalorder %s19, 1
    %p65 = por %p63, %p64
    %p66 = scmp.ne.s32.totalorder %s55, %s56
    %p67 = scmp.eq.s32.totalorder %s19, 0
    %p68 = por %p66, %p67
    %p69 = scmp.ne.s32.totalorder %s55, %s56
    %p70 = scmp.eq.s32.totalorder %s20, 1
    %p71 = por %p69, %p70
    %p73 = scmp.ne.s32.totalorder %s56, %s72
    %p74 = scmp.eq.s32.totalorder %s20, 0
    %p75 = por %p73, %p74
    %s76 = ssub.s32 %s14, %s21
    %p77 = scmp.eq.s32.totalorder %s76, 0
    %s79 = sadd.s32 %s78, 1
    %s80 = scalar_select %p77, %s78, %s79
    %p83 = pneg %p77
    %p84 = scmp.eq.s32.totalorder %s14, 1
    %p85 = por %p83, %p84
    %p86 = scmp.ne.s32.totalorder %s78, %s81
    %p87 = scmp.eq.s32.totalorder %s14, 0
    %p88 = por %p86, %p87
    %p89 = scmp.ne.s32.totalorder %s78, %s81
    %p90 = scmp.eq.s32.totalorder %s19, 1
    %p91 = por %p89, %p90
    %p92 = scmp.ne.s32.totalorder %s81, %s82
    %p93 = scmp.eq.s32.totalorder %s19, 0
    %p94 = por %p92, %p93
    %p95 = scmp.ne.s32.totalorder %s81, %s82
    %p96 = scmp.eq.s32.totalorder %s20, 1
    %p97 = por %p95, %p96
    %p99 = scmp.ne.s32.totalorder %s82, %s98
    %p100 = scmp.eq.s32.totalorder %s20, 0
    %p101 = por %p99, %p100
    %s102 = ssub.s32 %s14, %s21
    %p103 = scmp.eq.s32.totalorder %s102, 0
    %s105 = sadd.s32 %s104, 1
    %s106 = scalar_select %p103, %s104, %s105
    %p109 = pneg %p103
    %p110 = scmp.eq.s32.totalorder %s14, 1
    %p111 = por %p109, %p110
    %p112 = scmp.ne.s32.totalorder %s104, %s107
    %p113 = scmp.eq.s32.totalorder %s14, 0
    %p114 = por %p112, %p113
    %p115 = scmp.ne.s32.totalorder %s104, %s107
    %p116 = scmp.eq.s32.totalorder %s19, 1
    %p117 = por %p115, %p116
    %p118 = scmp.ne.s32.totalorder %s107, %s108
    %p119 = scmp.eq.s32.totalorder %s19, 0
    %p120 = por %p118, %p119
    %p121 = scmp.ne.s32.totalorder %s107, %s108
    %p122 = scmp.eq.s32.totalorder %s20, 1
    %p123 = por %p121, %p122
    %p125 = scmp.ne.s32.totalorder %s108, %s124
    %p126 = scmp.eq.s32.totalorder %s20, 0
    %p127 = por %p125, %p126
    %s128 = ssub.s32 %s14, %s21
    %p129 = scmp.eq.s32.totalorder %s128, 0
    %s131 = sadd.s32 %s130, 1
    %s132 = scalar_select %p129, %s130, %s131
    %p135 = pneg %p129
    %p136 = scmp.eq.s32.totalorder %s14, 1
    %p137 = por %p135, %p136
    %p138 = scmp.ne.s32.totalorder %s130, %s133
    %p139 = scmp.eq.s32.totalorder %s14, 0
    %p140 = por %p138, %p139
    %p141 = scmp.ne.s32.totalorder %s130, %s133
    %p142 = scmp.eq.s32.totalorder %s19, 1
    %p143 = por %p141, %p142
    %p144 = scmp.ne.s32.totalorder %s133, %s134
    %p145 = scmp.eq.s32.totalorder %s19, 0
    %p146 = por %p144, %p145
    %p147 = scmp.ne.s32.totalorder %s133, %s134
    %p148 = scmp.eq.s32.totalorder %s20, 1
    %p149 = por %p147, %p148
    %p151 = scmp.ne.s32.totalorder %s134, %s150
    %p152 = scmp.eq.s32.totalorder %s20, 0
    %p153 = por %p151, %p152
    %s154 = ssub.s32 %s14, %s21
    %p155 = scmp.eq.s32.totalorder %s154, 0
    %s157 = sadd.s32 %s156, 1
    %s158 = scalar_select %p155, %s156, %s157
    %p161 = pneg %p155
    %p162 = scmp.eq.s32.totalorder %s14, 1
    %p163 = por %p161, %p162
    %p164 = scmp.ne.s32.totalorder %s156, %s159
    %p165 = scmp.eq.s32.totalorder %s14, 0
    %p166 = por %p164, %p165
    %p167 = scmp.ne.s32.totalorder %s156, %s159
    %p168 = scmp.eq.s32.totalorder %s19, 1
    %p169 = por %p167, %p168
    %p170 = scmp.ne.s32.totalorder %s159, %s160
    %p171 = scmp.eq.s32.totalorder %s19, 0
    %p172 = por %p170, %p171
    %p173 = scmp.ne.s32.totalorder %s159, %s160
    %p174 = scmp.eq.s32.totalorder %s20, 1
    %p175 = por %p173, %p174
    %p177 = scmp.ne.s32.totalorder %s160, %s176
    %p178 = scmp.eq.s32.totalorder %s20, 0
    %p179 = por %p177, %p178
    %s181 = sadd.s32 %s180, 1
    %p184 = scmp.eq.s32.totalorder %s14, 1
    %p185 = scmp.ne.s32.totalorder %s180, %s182
    %p186 = scmp.eq.s32.totalorder %s14, 0
    %p187 = por %p185, %p186
    %p188 = scmp.ne.s32.totalorder %s180, %s182
    %p189 = scmp.eq.s32.totalorder %s19, 1
    %p190 = por %p188, %p189
    %p191 = scmp.ne.s32.totalorder %s182, %s183
    %p192 = scmp.eq.s32.totalorder %s19, 0
    %p193 = por %p191, %p192
    %p194 = scmp.ne.s32.totalorder %s182, %s183
    %p195 = scmp.eq.s32.totalorder %s20, 1
    %p196 = por %p194, %p195
    %p198 = scmp.ne.s32.totalorder %s183, %s197
    %p199 = scmp.eq.s32.totalorder %s20, 0
    %p200 = por %p198, %p199
    %s202 = sadd.s32 %s201, 1
    %p205 = scmp.eq.s32.totalorder %s14, 1
    %p206 = scmp.ne.s32.totalorder %s201, %s203
    %p207 = scmp.eq.s32.totalorder %s14, 0
    %p208 = por %p206, %p207
    %p209 = scmp.ne.s32.totalorder %s201, %s203
    %p210 = scmp.eq.s32.totalorder %s19, 1
    %p211 = por %p209, %p210
    %p212 = scmp.ne.s32.totalorder %s203, %s204
    %p213 = scmp.eq.s32.totalorder %s19, 0
    %p214 = por %p212, %p213
    %p215 = scmp.ne.s32.totalorder %s203, %s204
    %p216 = scmp.eq.s32.totalorder %s20, 1
    %p217 = por %p215, %p216
    %p219 = scmp.ne.s32.totalorder %s204, %s218
    %p220 = scmp.eq.s32.totalorder %s20, 0
    %p221 = por %p219, %p220
    %s222 = ssub.s32 %s14, %s21
    %p223 = scmp.eq.s32.totalorder %s222, 0
    %s225 = sadd.s32 %s224, 1
    %s226 = scalar_select %p223, %s224, %s225
    %p229 = pneg %p223
    %p230 = scmp.eq.s32.totalorder %s14, 1
    %p231 = por %p229, %p230
    %p232 = scmp.ne.s32.totalorder %s224, %s227
    %p233 = scmp.eq.s32.totalorder %s14, 0
    %p234 = por %p232, %p233
    %p235 = scmp.ne.s32.totalorder %s224, %s227
    %p236 = scmp.eq.s32.totalorder %s19, 1
    %p237 = por %p235, %p236
    %p238 = scmp.ne.s32.totalorder %s227, %s228
    %p239 = scmp.eq.s32.totalorder %s19, 0
    %p240 = por %p238, %p239
    %p241 = scmp.ne.s32.totalorder %s227, %s228
    %p242 = scmp.eq.s32.totalorder %s20, 1
    %p243 = por %p241, %p242
    %p245 = scmp.ne.s32.totalorder %s228, %s244
    %p246 = scmp.eq.s32.totalorder %s20, 0
    %p247 = por %p245, %p246
    %p248 = scmp.le.s32.totalorder 1, %s14
    %p249 = scmp.lt.s32.totalorder %s14, 3
    %p250 = pnand %p248, %p249
    %p251 = pneg %p250
    // Predicated region
    $region9: #{cls_wise_relation_forward.1} parent=5 // pred_check
      _
    $region10: #{cls_wise_relation_forward.1} parent=5 // pred_check_branch
      %253 = sbr.rel (%p250) target = $region12
    $region11: #{cls_wise_relation_forward.1} parent=5 // pred_region
      %s254 = ssub.s32 %s14, 1
      // Predicated region
      $region13: #{cls_wise_relation_forward.1} parent=11 // pred_check
        %p255 = pneg %p193
      $region14: #{cls_wise_relation_forward.1} parent=11 // pred_check_branch
        %257 = sbr.rel (%p255) target = $region16
      $region15: #{cls_wise_relation_forward.1} parent=11 // pred_region
        _
      $region16: #{cls_wise_relation_forward.1} parent=11 // pred_fallthru
        _
      // Predicated region
      $region17: #{cls_wise_relation_forward.1} parent=11 // pred_check
        %p258 = pneg %p214
      $region18: #{cls_wise_relation_forward.1} parent=11 // pred_check_branch
        %260 = sbr.rel (%p258) target = $region20
      $region19: #{cls_wise_relation_forward.1} parent=11 // pred_region
        _
      $region20: #{cls_wise_relation_forward.1} parent=11 // pred_fallthru
        _
    $region12: #{cls_wise_relation_forward.1} parent=5 // pred_fallthru
      _
    %p261 = scmp.lt.s32.totalorder %s14, 2
    // Predicated region
    $region21: #{cls_wise_relation_forward.1} parent=5 // pred_check
      %p262 = pneg %p261
    $region22: #{cls_wise_relation_forward.1} parent=5 // pred_check_branch
      %264 = sbr.rel (%p262) target = $region24
    $region23: #{cls_wise_relation_forward.1} parent=5 // pred_region
      // Predicated region
      $region25: #{cls_wise_relation_forward.1} parent=23 // pred_check
        %p265 = pneg %p36
      $region26: #{cls_wise_relation_forward.1} parent=23 // pred_check_branch
        %267 = sbr.rel (%p265) target = $region28
      $region27: #{cls_wise_relation_forward.1} parent=23 // pred_region
        %p268 = scmp.lt.s32.totalorder %s14, 1
        %s269 = scalar_select %p268, %s14, 1
        %p270 = scmp.lt.s32.totalorder %s14, 1
        %s271 = scalar_select %p270, %s14, 1
        %s272 = smul.addr %s269, 2
        %s273 = sadd.s32 %s271, %s272
        %s274 = smul.addr %s273, 8
        %s275 = scalar_lea.vmem %s0, %s274
      $region28: #{cls_wise_relation_forward.1} parent=23 // pred_fallthru
        _
      // Predicated region
      $region29: #{cls_wise_relation_forward.1} parent=23 // pred_check
        %p276 = pneg %p62
      $region30: #{cls_wise_relation_forward.1} parent=23 // pred_check_branch
        %278 = sbr.rel (%p276) target = $region32
      $region31: #{cls_wise_relation_forward.1} parent=23 // pred_region
        %p279 = scmp.lt.s32.totalorder %s14, 1
        %s280 = scalar_select %p279, %s14, 1
        %s281 = smul.addr %s280, 8
        %s282 = scalar_lea.vmem %s1, %s281
      $region32: #{cls_wise_relation_forward.1} parent=23 // pred_fallthru
        _
      // Predicated region
      $region33: #{cls_wise_relation_forward.1} parent=23 // pred_check
        %p283 = pneg %p88
      $region34: #{cls_wise_relation_forward.1} parent=23 // pred_check_branch
        %285 = sbr.rel (%p283) target = $region36
      $region35: #{cls_wise_relation_forward.1} parent=23 // pred_region
        %p286 = scmp.lt.s32.totalorder %s14, 1
        %s287 = scalar_select %p286, %s14, 1
        %s288 = smul.addr %s287, 16
        %s289 = smul.addr %s288, 8
        %s290 = scalar_lea.vmem %s2, %s289
      $region36: #{cls_wise_relation_forward.1} parent=23 // pred_fallthru
        _
      // Predicated region
      $region37: #{cls_wise_relation_forward.1} parent=23 // pred_check
        %p291 = pneg %p114
      $region38: #{cls_wise_relation_forward.1} parent=23 // pred_check_branch
        %293 = sbr.rel (%p291) target = $region40
      $region39: #{cls_wise_relation_forward.1} parent=23 // pred_region
        %p294 = scmp.lt.s32.totalorder %s14, 1
        %s295 = scalar_select %p294, %s14, 1
        %s296 = scalar_lea.vmem %s3, %s295
      $region40: #{cls_wise_relation_forward.1} parent=23 // pred_fallthru
        _
      // Predicated region
      $region41: #{cls_wise_relation_forward.1} parent=23 // pred_check
        %p297 = pneg %p140
      $region42: #{cls_wise_relation_forward.1} parent=23 // pred_check_branch
        %299 = sbr.rel (%p297) target = $region44
      $region43: #{cls_wise_relation_forward.1} parent=23 // pred_region
        %p300 = scmp.lt.s32.totalorder %s14, 1
        %s301 = scalar_select %p300, %s14, 1
        %s302 = smul.addr %s301, 4
        %s303 = smul.addr %s302, 8
        %s304 = scalar_lea.vmem %s4, %s303
      $region44: #{cls_wise_relation_forward.1} parent=23 // pred_fallthru
        _
      // Predicated region
      $region45: #{cls_wise_relation_forward.1} parent=23 // pred_check
        %p305 = pneg %p166
      $region46: #{cls_wise_relation_forward.1} parent=23 // pred_check_branch
        %307 = sbr.rel (%p305) target = $region48
      $region47: #{cls_wise_relation_forward.1} parent=23 // pred_region
        %p308 = scmp.lt.s32.totalorder %s14, 1
        %s309 = scalar_select %p308, %s14, 1
        %s310 = scalar_lea.vmem %s5, %s309
      $region48: #{cls_wise_relation_forward.1} parent=23 // pred_fallthru
        _
    $region24: #{cls_wise_relation_forward.1} parent=5 // pred_fallthru
      _
    %p311 = scmp.le.s32.totalorder 1, %s14
    %p312 = scmp.lt.s32.totalorder %s14, 3
    %p313 = pnand %p311, %p312
    %p314 = pneg %p313
    // Predicated region
    $region49: #{cls_wise_relation_forward.1} parent=5 // pred_check
      _
    $region50: #{cls_wise_relation_forward.1} parent=5 // pred_check_branch
      %316 = sbr.rel (%p313) target = $region52
    $region51: #{cls_wise_relation_forward.1} parent=5 // pred_region
      %s317 = ssub.s32 %s14, 1
      %p318 = scmp.lt.s32.totalorder %s19, 1
      %s319 = scalar_select %p318, %s19, 1
      %p320 = scmp.lt.s32.totalorder %s19, 1
      %s321 = scalar_select %p320, %s19, 1
      %s322 = smul.addr %s319, 2
      %s323 = sadd.s32 %s321, %s322
      %s324 = smul.addr %s323, 8
      %s325 = scalar_lea.vmem %s0, %s324
      %p326 = pneg %p42
      %p327 = pneg %p39
      %p328 = scmp.lt.s32.totalorder %s19, 1
      %s329 = scalar_select %p328, %s19, 1
      %s330 = smul.addr %s329, 8
      %s331 = scalar_lea.vmem %s1, %s330
      %p332 = pneg %p68
      %p333 = pneg %p65
      %p334 = scmp.lt.s32.totalorder %s19, 1
      %s335 = scalar_select %p334, %s19, 1
      %s336 = smul.addr %s335, 16
      %s337 = smul.addr %s336, 8
      %s338 = scalar_lea.vmem %s2, %s337
      %p339 = pneg %p94
      %p340 = pneg %p91
      %p341 = scmp.lt.s32.totalorder %s19, 1
      %s342 = scalar_select %p341, %s19, 1
      %s343 = scalar_lea.vmem %s3, %s342
      %p344 = pneg %p120
      %p345 = pneg %p117
      %p346 = scmp.lt.s32.totalorder %s19, 1
      %s347 = scalar_select %p346, %s19, 1
      %s348 = smul.addr %s347, 4
      %s349 = smul.addr %s348, 8
      %s350 = scalar_lea.vmem %s4, %s349
      %p351 = pneg %p146
      %p352 = pneg %p143
      %p353 = scmp.lt.s32.totalorder %s19, 1
      %s354 = scalar_select %p353, %s19, 1
      %s355 = scalar_lea.vmem %s5, %s354
      %p356 = pneg %p172
      %p357 = pneg %p169
      %p358 = pneg %p193
      %p359 = pneg %p190
      %p360 = pneg %p214
      %p361 = pneg %p211
      %p362 = pneg %p240
      %p363 = pneg %p237
      %p364 = scmp.lt.s32.totalorder %s19, 1
      %s365 = scalar_select %p364, %s19, 1
      %s366 = smul.addr %s365, 8
      %s367 = scalar_lea.vmem %s8, %s366
      %p368 = scmp.lt.s32.totalorder %s19, 1
      %s369 = scalar_select %p368, %s19, 1
      %p370 = scmp.lt.s32.totalorder %s19, 1
      %s371 = scalar_select %p370, %s19, 1
      %s372 = smul.addr %s369, 2
      %s373 = sadd.s32 %s371, %s372
      %s374 = smul.addr %s373, 8
      %s375 = scalar_lea.vmem %s0, %s374
      %p376 = scmp.lt.s32.totalorder %s19, 1
      %s377 = scalar_select %p376, %s19, 1
      %s378 = smul.addr %s377, 8
      %s379 = scalar_lea.vmem %s1, %s378
      %p380 = scmp.lt.s32.totalorder %s19, 1
      %s381 = scalar_select %p380, %s19, 1
      %s382 = smul.addr %s381, 16
      %s383 = smul.addr %s382, 8
      %s384 = scalar_lea.vmem %s2, %s383
      %p385 = scmp.lt.s32.totalorder %s19, 1
      %s386 = scalar_select %p385, %s19, 1
      %s387 = scalar_lea.vmem %s3, %s386
      %p388 = scmp.lt.s32.totalorder %s19, 1
      %s389 = scalar_select %p388, %s19, 1
      %s390 = smul.addr %s389, 4
      %s391 = smul.addr %s390, 8
      %s392 = scalar_lea.vmem %s4, %s391
      %p393 = scmp.lt.s32.totalorder %s19, 1
      %s394 = scalar_select %p393, %s19, 1
      %s395 = scalar_lea.vmem %s5, %s394
      %p396 = scmp.lt.s32.totalorder %s19, 1
      %s397 = scalar_select %p396, %s19, 1
      %s398 = smul.addr %s397, 8
      %s399 = scalar_lea.vmem %s8, %s398
      %v400 = vld [vmem:[%s379] sm:$0xff]
      %v401 = vld [vmem:[%s375] sm:$0xff]
      %v402 = vld [vmem:[%s384] sm:$0xff]
      %v403 = vld [vmem:[%s384 + $0x8] sm:$0xff]
      %v404 = vld [vmem:[%s384 + $0x10] sm:$0xff]
      %v405 = vld [vmem:[%s384 + $0x18] sm:$0xff]
      %v406 = vld [vmem:[%s384 + $0x20] sm:$0xff]
      %v407 = vld [vmem:[%s384 + $0x28] sm:$0xff]
      %v408 = vld [vmem:[%s384 + $0x30] sm:$0xff]
      %v409 = vld [vmem:[%s384 + $0x38] sm:$0xff]
      %v410 = vld [vmem:[%s384 + $0x40] sm:$0xff]
      %v411 = vld [vmem:[%s384 + $0x48] sm:$0xff]
      %v412 = vld [vmem:[%s384 + $0x50] sm:$0xff]
      %v413 = vld [vmem:[%s384 + $0x58] sm:$0xff]
      %v414 = vld [vmem:[%s384 + $0x60] sm:$0xff]
      %v415 = vld [vmem:[%s384 + $0x68] sm:$0xff]
      %v416 = vld [vmem:[%s384 + $0x70] sm:$0xff]
      %v417 = vld [vmem:[%s384 + $0x78] sm:$0xff]
      %v418 = vld [vmem:[%s387] sm:$0x1]
      %v420 = vlaneseq
      %v421 = vshrl.u32 %v420, 7
      %v422 = vsub.s32 0, %v421
      %v423 = vrot.slane %v418, %v422
      %425 = vmatprep.subr.mxu0 0.0
      %426 = vmatpush1.msra.mxu0 %v417
      %427 = vmatprep.subr.mxu0 0.0
      %428 = vmatpush1.msra.mxu0 %v416
      %429 = vmatprep.subr.mxu0 0.0
      %430 = vmatpush1.msra.mxu0 %v415
      %431 = vmatprep.subr.mxu0 0.0
      %432 = vmatpush1.msra.mxu0 %v414
      %433 = vmatprep.subr.mxu0 0.0
      %434 = vmatpush1.msra.mxu0 %v413
      %435 = vmatprep.subr.mxu0 0.0
      %436 = vmatpush1.msra.mxu0 %v412
      %437 = vmatprep.subr.mxu0 0.0
      %438 = vmatpush1.msra.mxu0 %v411
      %439 = vmatprep.subr.mxu0 0.0
      %440 = vmatpush1.msra.mxu0 %v410
      %441 = vmatprep.subr.mxu0 0.0
      %442 = vmatpush1.msra.mxu0 %v409
      %443 = vmatprep.subr.mxu0 0.0
      %444 = vmatpush1.msra.mxu0 %v408
      %445 = vmatprep.subr.mxu0 0.0
      %446 = vmatpush1.msra.mxu0 %v407
      %447 = vmatprep.subr.mxu0 0.0
      %448 = vmatpush1.msra.mxu0 %v406
      %449 = vmatprep.subr.mxu0 0.0
      %450 = vmatpush1.msra.mxu0 %v405
      %451 = vmatprep.subr.mxu0 0.0
      %452 = vmatpush1.msra.mxu0 %v404
      %453 = vmatprep.subr.mxu0 0.0
      %454 = vmatpush1.msra.mxu0 %v403
      %455 = vmatprep.subr.mxu0 0.0
      %456 = vmatpush1.msra.mxu0 %v402
      %457 = vmatprep.subr.mxu0 0.0
      %458 = vmatpush2.msra.mxu0 0.0
      %459 = vmatprep.subr.mxu0 0.0
      %460 = vmatpush2.msra.mxu0 0.0
      %461 = vmatprep.subr.mxu0 0.0
      %462 = vmatpush2.msra.mxu0 0.0
      %463 = vmatprep.subr.mxu0 0.0
      %464 = vmatpush2.msra.mxu0 0.0
      %465 = vmatprep.subr.mxu0 0.0
      %466 = vmatpush2.msra.mxu0 0.0
      %467 = vmatprep.subr.mxu0 0.0
      %468 = vmatpush2.msra.mxu0 0.0
      %469 = vmatprep.subr.mxu0 0.0
      %470 = vmatpush2.msra.mxu0 0.0
      %471 = vmatprep.subr.mxu0 0.0
      %472 = vmatpush2.msra.mxu0 0.0
      %473 = vmatprep.subr.mxu0 0.0
      %474 = vmatpush2.msra.mxu0 0.0
      %475 = vmatprep.subr.mxu0 0.0
      %476 = vmatpush2.msra.mxu0 0.0
      %477 = vmatprep.subr.mxu0 0.0
      %478 = vmatpush2.msra.mxu0 0.0
      %479 = vmatprep.subr.mxu0 0.0
      %480 = vmatpush2.msra.mxu0 0.0
      %481 = vmatprep.subr.mxu0 0.0
      %482 = vmatpush2.msra.mxu0 0.0
      %483 = vmatprep.subr.mxu0 0.0
      %484 = vmatpush2.msra.mxu0 0.0
      %485 = vmatprep.subr.mxu0 0.0
      %486 = vmatpush2.msra.mxu0 0.0
      %487 = vmatprep.subr.mxu0 0.0
      %488 = vmatpush2.msra.mxu0 0.0
      %489 = vmatprep.mubr.f32.mxu0 0.0
      %490 = vmatmul.mubr.f32.gmra.mxu0 %v401
      %v491 = vpop.f32.mrf.mxu0
      %v492 = vadd.f32 %v423, %v491
      %v493 = vpop.f32.mrf.mxu0
      %494 = vdwg.mxu0
      %v495 = vmax.f32 %v492, 0.0
      %v496 = vmax.f32 %v495, 1e-06
      %v497 = vlog2.pop %v496
      %v498 = vmul.f32 %v497, 0.6931472
      %v499 = vld [vmem:[%s392] sm:$0xff]
      %v500 = vld [vmem:[%s392 + $0x8] sm:$0xff]
      %v501 = vld [vmem:[%s392 + $0x10] sm:$0xff]
      %v502 = vld [vmem:[%s392 + $0x18] sm:$0xff]
      %v503 = vld [vmem:[%s395] sm:$0x1]
      %v505 = vlaneseq
      %v506 = vshrl.u32 %v505, 7
      %v507 = vsub.s32 0, %v506
      %v508 = vrot.slane %v503, %v507
      %vm510 = vcmask 261120
      %v512 = vsel %vm510, %v400, 0
      %514 = vmatprep.subr.mxu0 0.0
      %515 = vmatpush1.msra.mxu0 0.0
      %516 = vmatprep.subr.mxu0 0.0
      %517 = vmatpush1.msra.mxu0 0.0
      %518 = vmatprep.subr.mxu0 0.0
      %519 = vmatpush1.msra.mxu0 0.0
      %520 = vmatprep.subr.mxu0 0.0
      %521 = vmatpush1.msra.mxu0 0.0
      %522 = vmatprep.subr.mxu0 0.0
      %523 = vmatpush1.msra.mxu0 0.0
      %524 = vmatprep.subr.mxu0 0.0
      %525 = vmatpush1.msra.mxu0 0.0
      %526 = vmatprep.subr.mxu0 0.0
      %527 = vmatpush1.msra.mxu0 0.0
      %528 = vmatprep.subr.mxu0 0.0
      %529 = vmatpush1.msra.mxu0 0.0
      %530 = vmatprep.subr.mxu0 0.0
      %531 = vmatpush1.msra.mxu0 0.0
      %532 = vmatprep.subr.mxu0 0.0
      %533 = vmatpush1.msra.mxu0 0.0
      %534 = vmatprep.subr.mxu0 0.0
      %535 = vmatpush1.msra.mxu0 0.0
      %536 = vmatprep.subr.mxu0 0.0
      %537 = vmatpush1.msra.mxu0 0.0
      %538 = vmatprep.subr.mxu0 0.0
      %539 = vmatpush1.msra.mxu0 %v502
      %540 = vmatprep.subr.mxu0 0.0
      %541 = vmatpush1.msra.mxu0 %v501
      %542 = vmatprep.subr.mxu0 0.0
      %543 = vmatpush1.msra.mxu0 %v500
      %544 = vmatprep.subr.mxu0 0.0
      %545 = vmatpush1.msra.mxu0 %v499
      %546 = vmatprep.subr.mxu0 0.0
      %547 = vmatpush2.msra.mxu0 0.0
      %548 = vmatprep.subr.mxu0 0.0
      %549 = vmatpush2.msra.mxu0 0.0
      %550 = vmatprep.subr.mxu0 0.0
      %551 = vmatpush2.msra.mxu0 0.0
      %552 = vmatprep.subr.mxu0 0.0
      %553 = vmatpush2.msra.mxu0 0.0
      %554 = vmatprep.subr.mxu0 0.0
      %555 = vmatpush2.msra.mxu0 0.0
      %556 = vmatprep.subr.mxu0 0.0
      %557 = vmatpush2.msra.mxu0 0.0
      %558 = vmatprep.subr.mxu0 0.0
      %559 = vmatpush2.msra.mxu0 0.0
      %560 = vmatprep.subr.mxu0 0.0
      %561 = vmatpush2.msra.mxu0 0.0
      %562 = vmatprep.subr.mxu0 0.0
      %563 = vmatpush2.msra.mxu0 0.0
      %564 = vmatprep.subr.mxu0 0.0
      %565 = vmatpush2.msra.mxu0 0.0
      %566 = vmatprep.subr.mxu0 0.0
      %567 = vmatpush2.msra.mxu0 0.0
      %568 = vmatprep.subr.mxu0 0.0
      %569 = vmatpush2.msra.mxu0 0.0
      %570 = vmatprep.subr.mxu0 0.0
      %571 = vmatpush2.msra.mxu0 0.0
      %572 = vmatprep.subr.mxu0 0.0
      %573 = vmatpush2.msra.mxu0 0.0
      %574 = vmatprep.subr.mxu0 0.0
      %575 = vmatpush2.msra.mxu0 0.0
      %576 = vmatprep.subr.mxu0 0.0
      %577 = vmatpush2.msra.mxu0 0.0
      %578 = vmatprep.mubr.f32.mxu0 0.0
      %579 = vmatmul.mubr.f32.gmra.mxu0 %v512
      %v580 = vpop.f32.mrf.mxu0
      %v581 = vadd.f32 %v508, %v580
      %v582 = vpop.f32.mrf.mxu0
      %583 = vdwg.mxu0
      %585 = vrot.lane.b32.xlu0 %v581, 96
      %v586 = vpop.permute.xlu0 %585
      %vm587 = vcmask 64512
      %v588 = vsel %vm587, %v586, 0
      %v590 = vsel %vm587, %v581, 0
      %592 = vmatprep.subr.mxu0 0.0
      %593 = vmatpush1.xpose.msra.mxu0 0.0
      %594 = vmatprep.subr.mxu0 0.0
      %595 = vmatpush1.xpose.msra.mxu0 0.0
      %596 = vmatprep.subr.mxu0 0.0
      %597 = vmatpush1.xpose.msra.mxu0 0.0
      %598 = vmatprep.subr.mxu0 0.0
      %599 = vmatpush1.xpose.msra.mxu0 0.0
      %600 = vmatprep.subr.mxu0 0.0
      %601 = vmatpush1.xpose.msra.mxu0 0.0
      %602 = vmatprep.subr.mxu0 0.0
      %603 = vmatpush1.xpose.msra.mxu0 0.0
      %604 = vmatprep.subr.mxu0 0.0
      %605 = vmatpush1.xpose.msra.mxu0 0.0
      %606 = vmatprep.subr.mxu0 0.0
      %607 = vmatpush1.xpose.msra.mxu0 0.0
      %608 = vmatprep.subr.mxu0 0.0
      %609 = vmatpush1.xpose.msra.mxu0 0.0
      %610 = vmatprep.subr.mxu0 0.0
      %611 = vmatpush1.xpose.msra.mxu0 0.0
      %612 = vmatprep.subr.mxu0 0.0
      %613 = vmatpush1.xpose.msra.mxu0 0.0
      %614 = vmatprep.subr.mxu0 0.0
      %615 = vmatpush1.xpose.msra.mxu0 0.0
      %616 = vmatprep.subr.mxu0 0.0
      %617 = vmatpush1.xpose.msra.mxu0 0.0
      %618 = vmatprep.subr.mxu0 0.0
      %619 = vmatpush1.xpose.msra.mxu0 0.0
      %620 = vmatprep.subr.mxu0 0.0
      %621 = vmatpush1.xpose.msra.mxu0 0.0
      %622 = vmatprep.subr.mxu0 0.0
      %623 = vmatpush1.xpose.msra.mxu0 %v590
      %624 = vmatprep.subr.mxu0 0.0
      %625 = vmatpush2.xpose.msra.mxu0 0.0
      %626 = vmatprep.subr.mxu0 0.0
      %627 = vmatpush2.xpose.msra.mxu0 0.0
      %628 = vmatprep.subr.mxu0 0.0
      %629 = vmatpush2.xpose.msra.mxu0 0.0
      %630 = vmatprep.subr.mxu0 0.0
      %631 = vmatpush2.xpose.msra.mxu0 0.0
      %632 = vmatprep.subr.mxu0 0.0
      %633 = vmatpush2.xpose.msra.mxu0 0.0
      %634 = vmatprep.subr.mxu0 0.0
      %635 = vmatpush2.xpose.msra.mxu0 0.0
      %636 = vmatprep.subr.mxu0 0.0
      %637 = vmatpush2.xpose.msra.mxu0 0.0
      %638 = vmatprep.subr.mxu0 0.0
      %639 = vmatpush2.xpose.msra.mxu0 0.0
      %640 = vmatprep.subr.mxu0 0.0
      %641 = vmatpush2.xpose.msra.mxu0 0.0
      %642 = vmatprep.subr.mxu0 0.0
      %643 = vmatpush2.xpose.msra.mxu0 0.0
      %644 = vmatprep.subr.mxu0 0.0
      %645 = vmatpush2.xpose.msra.mxu0 0.0
      %646 = vmatprep.subr.mxu0 0.0
      %647 = vmatpush2.xpose.msra.mxu0 0.0
      %648 = vmatprep.subr.mxu0 0.0
      %649 = vmatpush2.xpose.msra.mxu0 0.0
      %650 = vmatprep.subr.mxu0 0.0
      %651 = vmatpush2.xpose.msra.mxu0 0.0
      %652 = vmatprep.subr.mxu0 0.0
      %653 = vmatpush2.xpose.msra.mxu0 0.0
      %654 = vmatprep.subr.mxu0 0.0
      %655 = vmatpush2.xpose.msra.mxu0 0.0
      %656 = vmatprep.mubr.f32.mxu0 0.0
      %657 = vmatmul.mubr.f32.gmra.mxu0 %v588
      %v658 = vpop.f32.mrf.mxu0
      %v659 = vadd.f32 0.0, %v658
      %v660 = vpop.f32.mrf.mxu0
      %661 = vdwg.mxu0
      %v662 = vmul.f32 %v659, 0.35355338
      %v663 = vadd.f32 %v498, %v662
      %664 = vrot.lane.b32.xlu0 %v581, 88
      %v665 = vpop.permute.xlu0 %664
      %666 = vrot.lane.b32.xlu0 %v581, 120
      %v667 = vpop.permute.xlu0 %666
      %v668 = vsel %vm587, %v665, 0
      %v670 = vsel %vm587, %v667, 0
      %672 = vmatprep.subr.mxu0 0.0
      %673 = vmatpush1.xpose.msra.mxu0 0.0
      %674 = vmatprep.subr.mxu0 0.0
      %675 = vmatpush1.xpose.msra.mxu0 0.0
      %676 = vmatprep.subr.mxu0 0.0
      %677 = vmatpush1.xpose.msra.mxu0 0.0
      %678 = vmatprep.subr.mxu0 0.0
      %679 = vmatpush1.xpose.msra.mxu0 0.0
      %680 = vmatprep.subr.mxu0 0.0
      %681 = vmatpush1.xpose.msra.mxu0 0.0
      %682 = vmatprep.subr.mxu0 0.0
      %683 = vmatpush1.xpose.msra.mxu0 0.0
      %684 = vmatprep.subr.mxu0 0.0
      %685 = vmatpush1.xpose.msra.mxu0 0.0
      %686 = vmatprep.subr.mxu0 0.0
      %687 = vmatpush1.xpose.msra.mxu0 0.0
      %688 = vmatprep.subr.mxu0 0.0
      %689 = vmatpush1.xpose.msra.mxu0 0.0
      %690 = vmatprep.subr.mxu0 0.0
      %691 = vmatpush1.xpose.msra.mxu0 0.0
      %692 = vmatprep.subr.mxu0 0.0
      %693 = vmatpush1.xpose.msra.mxu0 0.0
      %694 = vmatprep.subr.mxu0 0.0
      %695 = vmatpush1.xpose.msra.mxu0 0.0
      %696 = vmatprep.subr.mxu0 0.0
      %697 = vmatpush1.xpose.msra.mxu0 0.0
      %698 = vmatprep.subr.mxu0 0.0
      %699 = vmatpush1.xpose.msra.mxu0 0.0
      %700 = vmatprep.subr.mxu0 0.0
      %701 = vmatpush1.xpose.msra.mxu0 0.0
      %702 = vmatprep.subr.mxu0 0.0
      %703 = vmatpush1.xpose.msra.mxu0 %v670
      %704 = vmatprep.subr.mxu0 0.0
      %705 = vmatpush2.xpose.msra.mxu0 0.0
      %706 = vmatprep.subr.mxu0 0.0
      %707 = vmatpush2.xpose.msra.mxu0 0.0
      %708 = vmatprep.subr.mxu0 0.0
      %709 = vmatpush2.xpose.msra.mxu0 0.0
      %710 = vmatprep.subr.mxu0 0.0
      %711 = vmatpush2.xpose.msra.mxu0 0.0
      %712 = vmatprep.subr.mxu0 0.0
      %713 = vmatpush2.xpose.msra.mxu0 0.0
      %714 = vmatprep.subr.mxu0 0.0
      %715 = vmatpush2.xpose.msra.mxu0 0.0
      %716 = vmatprep.subr.mxu0 0.0
      %717 = vmatpush2.xpose.msra.mxu0 0.0
      %718 = vmatprep.subr.mxu0 0.0
      %719 = vmatpush2.xpose.msra.mxu0 0.0
      %720 = vmatprep.subr.mxu0 0.0
      %721 = vmatpush2.xpose.msra.mxu0 0.0
      %722 = vmatprep.subr.mxu0 0.0
      %723 = vmatpush2.xpose.msra.mxu0 0.0
      %724 = vmatprep.subr.mxu0 0.0
      %725 = vmatpush2.xpose.msra.mxu0 0.0
      %726 = vmatprep.subr.mxu0 0.0
      %727 = vmatpush2.xpose.msra.mxu0 0.0
      %728 = vmatprep.subr.mxu0 0.0
      %729 = vmatpush2.xpose.msra.mxu0 0.0
      %730 = vmatprep.subr.mxu0 0.0
      %731 = vmatpush2.xpose.msra.mxu0 0.0
      %732 = vmatprep.subr.mxu0 0.0
      %733 = vmatpush2.xpose.msra.mxu0 0.0
      %734 = vmatprep.subr.mxu0 0.0
      %735 = vmatpush2.xpose.msra.mxu0 0.0
      %736 = vmatprep.mubr.f32.mxu0 0.0
      %737 = vmatmul.mubr.f32.gmra.mxu0 %v668
      %v738 = vpop.f32.mrf.mxu0
      %v739 = vadd.f32 0.0, %v738
      %v740 = vpop.f32.mrf.mxu0
      %741 = vdwg.mxu0
      %v742 = vmul.f32 %v739, 0.35355338
      %744 = vrot.lane.b32.xlu0 %v742, 8
      %v745 = vpop.permute.xlu0 %744
      %v747 = vadd.f32 %v498, %v745
      %748 = vrot.lane.b32.xlu0 %v581, 80
      %v749 = vpop.permute.xlu0 %748
      %750 = vrot.lane.b32.xlu0 %v581, 112
      %v751 = vpop.permute.xlu0 %750
      %v752 = vsel %vm587, %v749, 0
      %v754 = vsel %vm587, %v751, 0
      %756 = vmatprep.subr.mxu0 0.0
      %757 = vmatpush1.xpose.msra.mxu0 0.0
      %758 = vmatprep.subr.mxu0 0.0
      %759 = vmatpush1.xpose.msra.mxu0 0.0
      %760 = vmatprep.subr.mxu0 0.0
      %761 = vmatpush1.xpose.msra.mxu0 0.0
      %762 = vmatprep.subr.mxu0 0.0
      %763 = vmatpush1.xpose.msra.mxu0 0.0
      %764 = vmatprep.subr.mxu0 0.0
      %765 = vmatpush1.xpose.msra.mxu0 0.0
      %766 = vmatprep.subr.mxu0 0.0
      %767 = vmatpush1.xpose.msra.mxu0 0.0
      %768 = vmatprep.subr.mxu0 0.0
      %769 = vmatpush1.xpose.msra.mxu0 0.0
      %770 = vmatprep.subr.mxu0 0.0
      %771 = vmatpush1.xpose.msra.mxu0 0.0
      %772 = vmatprep.subr.mxu0 0.0
      %773 = vmatpush1.xpose.msra.mxu0 0.0
      %774 = vmatprep.subr.mxu0 0.0
      %775 = vmatpush1.xpose.msra.mxu0 0.0
      %776 = vmatprep.subr.mxu0 0.0
      %777 = vmatpush1.xpose.msra.mxu0 0.0
      %778 = vmatprep.subr.mxu0 0.0
      %779 = vmatpush1.xpose.msra.mxu0 0.0
      %780 = vmatprep.subr.mxu0 0.0
      %781 = vmatpush1.xpose.msra.mxu0 0.0
      %782 = vmatprep.subr.mxu0 0.0
      %783 = vmatpush1.xpose.msra.mxu0 0.0
      %784 = vmatprep.subr.mxu0 0.0
      %785 = vmatpush1.xpose.msra.mxu0 0.0
      %786 = vmatprep.subr.mxu0 0.0
      %787 = vmatpush1.xpose.msra.mxu0 %v754
      %788 = vmatprep.subr.mxu0 0.0
      %789 = vmatpush2.xpose.msra.mxu0 0.0
      %790 = vmatprep.subr.mxu0 0.0
      %791 = vmatpush2.xpose.msra.mxu0 0.0
      %792 = vmatprep.subr.mxu0 0.0
      %793 = vmatpush2.xpose.msra.mxu0 0.0
      %794 = vmatprep.subr.mxu0 0.0
      %795 = vmatpush2.xpose.msra.mxu0 0.0
      %796 = vmatprep.subr.mxu0 0.0
      %797 = vmatpush2.xpose.msra.mxu0 0.0
      %798 = vmatprep.subr.mxu0 0.0
      %799 = vmatpush2.xpose.msra.mxu0 0.0
      %800 = vmatprep.subr.mxu0 0.0
      %801 = vmatpush2.xpose.msra.mxu0 0.0
      %802 = vmatprep.subr.mxu0 0.0
      %803 = vmatpush2.xpose.msra.mxu0 0.0
      %804 = vmatprep.subr.mxu0 0.0
      %805 = vmatpush2.xpose.msra.mxu0 0.0
      %806 = vmatprep.subr.mxu0 0.0
      %807 = vmatpush2.xpose.msra.mxu0 0.0
      %808 = vmatprep.subr.mxu0 0.0
      %809 = vmatpush2.xpose.msra.mxu0 0.0
      %810 = vmatprep.subr.mxu0 0.0
      %811 = vmatpush2.xpose.msra.mxu0 0.0
      %812 = vmatprep.subr.mxu0 0.0
      %813 = vmatpush2.xpose.msra.mxu0 0.0
      %814 = vmatprep.subr.mxu0 0.0
      %815 = vmatpush2.xpose.msra.mxu0 0.0
      %816 = vmatprep.subr.mxu0 0.0
      %817 = vmatpush2.xpose.msra.mxu0 0.0
      %818 = vmatprep.subr.mxu0 0.0
      %819 = vmatpush2.xpose.msra.mxu0 0.0
      %820 = vmatprep.mubr.f32.mxu0 0.0
      %821 = vmatmul.mubr.f32.gmra.mxu0 %v752
      %v822 = vpop.f32.mrf.mxu0
      %v823 = vadd.f32 0.0, %v822
      %v824 = vpop.f32.mrf.mxu0
      %825 = vdwg.mxu0
      %v826 = vmul.f32 %v823, 0.35355338
      %828 = vrot.lane.b32.xlu0 %v826, 16
      %v829 = vpop.permute.xlu0 %828
      %v831 = vadd.f32 %v498, %v829
      %832 = vrot.lane.b32.xlu0 %v581, 72
      %v833 = vpop.permute.xlu0 %832
      %834 = vrot.lane.b32.xlu0 %v581, 104
      %v835 = vpop.permute.xlu0 %834
      %v836 = vsel %vm587, %v833, 0
      %v838 = vsel %vm587, %v835, 0
      %840 = vmatprep.subr.mxu0 0.0
      %841 = vmatpush1.xpose.msra.mxu0 0.0
      %842 = vmatprep.subr.mxu0 0.0
      %843 = vmatpush1.xpose.msra.mxu0 0.0
      %844 = vmatprep.subr.mxu0 0.0
      %845 = vmatpush1.xpose.msra.mxu0 0.0
      %846 = vmatprep.subr.mxu0 0.0
      %847 = vmatpush1.xpose.msra.mxu0 0.0
      %848 = vmatprep.subr.mxu0 0.0
      %849 = vmatpush1.xpose.msra.mxu0 0.0
      %850 = vmatprep.subr.mxu0 0.0
      %851 = vmatpush1.xpose.msra.mxu0 0.0
      %852 = vmatprep.subr.mxu0 0.0
      %853 = vmatpush1.xpose.msra.mxu0 0.0
      %854 = vmatprep.subr.mxu0 0.0
      %855 = vmatpush1.xpose.msra.mxu0 0.0
      %856 = vmatprep.subr.mxu0 0.0
      %857 = vmatpush1.xpose.msra.mxu0 0.0
      %858 = vmatprep.subr.mxu0 0.0
      %859 = vmatpush1.xpose.msra.mxu0 0.0
      %860 = vmatprep.subr.mxu0 0.0
      %861 = vmatpush1.xpose.msra.mxu0 0.0
      %862 = vmatprep.subr.mxu0 0.0
      %863 = vmatpush1.xpose.msra.mxu0 0.0
      %864 = vmatprep.subr.mxu0 0.0
      %865 = vmatpush1.xpose.msra.mxu0 0.0
      %866 = vmatprep.subr.mxu0 0.0
      %867 = vmatpush1.xpose.msra.mxu0 0.0
      %868 = vmatprep.subr.mxu0 0.0
      %869 = vmatpush1.xpose.msra.mxu0 0.0
      %870 = vmatprep.subr.mxu0 0.0
      %871 = vmatpush1.xpose.msra.mxu0 %v838
      %872 = vmatprep.subr.mxu0 0.0
      %873 = vmatpush2.xpose.msra.mxu0 0.0
      %874 = vmatprep.subr.mxu0 0.0
      %875 = vmatpush2.xpose.msra.mxu0 0.0
      %876 = vmatprep.subr.mxu0 0.0
      %877 = vmatpush2.xpose.msra.mxu0 0.0
      %878 = vmatprep.subr.mxu0 0.0
      %879 = vmatpush2.xpose.msra.mxu0 0.0
      %880 = vmatprep.subr.mxu0 0.0
      %881 = vmatpush2.xpose.msra.mxu0 0.0
      %882 = vmatprep.subr.mxu0 0.0
      %883 = vmatpush2.xpose.msra.mxu0 0.0
      %884 = vmatprep.subr.mxu0 0.0
      %885 = vmatpush2.xpose.msra.mxu0 0.0
      %886 = vmatprep.subr.mxu0 0.0
      %887 = vmatpush2.xpose.msra.mxu0 0.0
      %888 = vmatprep.subr.mxu0 0.0
      %889 = vmatpush2.xpose.msra.mxu0 0.0
      %890 = vmatprep.subr.mxu0 0.0
      %891 = vmatpush2.xpose.msra.mxu0 0.0
      %892 = vmatprep.subr.mxu0 0.0
      %893 = vmatpush2.xpose.msra.mxu0 0.0
      %894 = vmatprep.subr.mxu0 0.0
      %895 = vmatpush2.xpose.msra.mxu0 0.0
      %896 = vmatprep.subr.mxu0 0.0
      %897 = vmatpush2.xpose.msra.mxu0 0.0
      %898 = vmatprep.subr.mxu0 0.0
      %899 = vmatpush2.xpose.msra.mxu0 0.0
      %900 = vmatprep.subr.mxu0 0.0
      %901 = vmatpush2.xpose.msra.mxu0 0.0
      %902 = vmatprep.subr.mxu0 0.0
      %903 = vmatpush2.xpose.msra.mxu0 0.0
      %904 = vmatprep.mubr.f32.mxu0 0.0
      %905 = vmatmul.mubr.f32.gmra.mxu0 %v836
      %v906 = vpop.f32.mrf.mxu0
      %v907 = vadd.f32 0.0, %v906
      %v908 = vpop.f32.mrf.mxu0
      %909 = vdwg.mxu0
      %v910 = vmul.f32 %v907, 0.35355338
      %912 = vrot.lane.b32.xlu0 %v910, 24
      %v913 = vpop.permute.xlu0 %912
      %v915 = vadd.f32 %v498, %v913
      %917 = vrot.lane.b32.xlu0 %v747, 120
      %v918 = vpop.permute.xlu0 %917
      %921 = vrot.lane.b32.xlu0 %v831, 112
      %v922 = vpop.permute.xlu0 %921
      %925 = vrot.lane.b32.xlu0 %v915, 104
      %v926 = vpop.permute.xlu0 %925
      %v928 = vsel %vm587, %v663, -inf
      %929 = vmax.xlane.f32.xlu0 %v928
      %v930 = vpop.xlane.xlu0 %929
      %v931 = vsel %vm587, %v918, -inf
      %932 = vmax.xlane.f32.xlu0 %v931
      %v933 = vpop.xlane.xlu0 %932
      %v934 = vsel %vm587, %v922, -inf
      %935 = vmax.xlane.f32.xlu0 %v934
      %v936 = vpop.xlane.xlu0 %935
      %v937 = vsel %vm587, %v926, -inf
      %938 = vmax.xlane.f32.xlu0 %v937
      %v939 = vpop.xlane.xlu0 %938
      %vm940 = vcmp.ge.f32.partialorder %v663, %v930
      %vm941 = vcmp.ge.f32.partialorder %v918, %v933
      %vm942 = vcmp.ge.f32.partialorder %v922, %v936
      %vm943 = vcmp.ge.f32.partialorder %v926, %v939
      %v944 = vsel %vm940, -inf, %v663
      %v945 = vsel %vm941, -inf, %v918
      %v946 = vsel %vm942, -inf, %v922
      %v947 = vsel %vm943, -inf, %v926
      %v948 = vsel %vm587, %v944, -inf
      %949 = vmax.xlane.f32.xlu0 %v948
      %v950 = vpop.xlane.xlu0 %949
      %v951 = vsel %vm587, %v945, -inf
      %952 = vmax.xlane.f32.xlu0 %v951
      %v953 = vpop.xlane.xlu0 %952
      %v954 = vsel %vm587, %v946, -inf
      %955 = vmax.xlane.f32.xlu0 %v954
      %v956 = vpop.xlane.xlu0 %955
      %v957 = vsel %vm587, %v947, -inf
      %958 = vmax.xlane.f32.xlu0 %v957
      %v959 = vpop.xlane.xlu0 %958
      %vm960 = vcmp.ge.f32.partialorder %v944, %v950
      %vm961 = vcmp.ge.f32.partialorder %v945, %v953
      %vm962 = vcmp.ge.f32.partialorder %v946, %v956
      %vm963 = vcmp.ge.f32.partialorder %v947, %v959
      %v964 = vsel %vm960, -inf, %v944
      %v965 = vsel %vm961, -inf, %v945
      %v966 = vsel %vm962, -inf, %v946
      %v967 = vsel %vm963, -inf, %v947
      %v968 = vsel %vm587, %v964, -inf
      %969 = vmax.xlane.f32.xlu0 %v968
      %v970 = vpop.xlane.xlu0 %969
      %v971 = vsel %vm587, %v965, -inf
      %972 = vmax.xlane.f32.xlu0 %v971
      %v973 = vpop.xlane.xlu0 %972
      %v974 = vsel %vm587, %v966, -inf
      %975 = vmax.xlane.f32.xlu0 %v974
      %v976 = vpop.xlane.xlu0 %975
      %v977 = vsel %vm587, %v967, -inf
      %978 = vmax.xlane.f32.xlu0 %v977
      %v979 = vpop.xlane.xlu0 %978
      %vm980 = vcmp.ge.f32.partialorder %v964, %v970
      %vm981 = vcmp.ge.f32.partialorder %v965, %v973
      %vm982 = vcmp.ge.f32.partialorder %v966, %v976
      %vm983 = vcmp.ge.f32.partialorder %v967, %v979
      %v984 = vsel %vm980, -inf, %v964
      %v985 = vsel %vm981, -inf, %v965
      %v986 = vsel %vm982, -inf, %v966
      %v987 = vsel %vm983, -inf, %v967
      %v988 = vsel %vm587, %v984, -inf
      %989 = vmax.xlane.f32.xlu0 %v988
      %v990 = vpop.xlane.xlu0 %989
      %v991 = vsel %vm587, %v985, -inf
      %992 = vmax.xlane.f32.xlu0 %v991
      %v993 = vpop.xlane.xlu0 %992
      %v994 = vsel %vm587, %v986, -inf
      %995 = vmax.xlane.f32.xlu0 %v994
      %v996 = vpop.xlane.xlu0 %995
      %v997 = vsel %vm587, %v987, -inf
      %998 = vmax.xlane.f32.xlu0 %v997
      %v999 = vpop.xlane.xlu0 %998
      %vm1000 = vcmp.ge.f32.partialorder %v663, %v990
      %vm1001 = vcmp.ge.f32.partialorder %v918, %v993
      %vm1002 = vcmp.ge.f32.partialorder %v922, %v996
      %vm1003 = vcmp.ge.f32.partialorder %v926, %v999
      %v1004 = vsub.f32 %v663, %v930
      %v1005 = vsub.f32 %v918, %v933
      %v1006 = vsub.f32 %v922, %v936
      %v1007 = vsub.f32 %v926, %v939
      %v1008 = vmul.f32 %v1004, 1.442695
      %v1009 = vpow.pop %v1008
      %v1010 = vmul.f32 %v1005, 1.442695
      %v1011 = vpow.pop %v1010
      %v1012 = vmul.f32 %v1006, 1.442695
      %v1013 = vpow.pop %v1012
      %v1014 = vmul.f32 %v1007, 1.442695
      %v1015 = vpow.pop %v1014
      %v1016 = vsel %vm1000, %v1009, 0.0
      %v1017 = vsel %vm1001, %v1011, 0.0
      %v1018 = vsel %vm1002, %v1013, 0.0
      %v1019 = vsel %vm1003, %v1015, 0.0
      %v1020 = vsel %vm587, %v1016, 0.0
      %1021 = vadd.xlane.f32.xlu0 %v1020
      %v1022 = vpop.xlane.xlu0 %1021
      %v1023 = vsel %vm587, %v1017, 0.0
      %1024 = vadd.xlane.f32.xlu0 %v1023
      %v1025 = vpop.xlane.xlu0 %1024
      %v1026 = vsel %vm587, %v1018, 0.0
      %1027 = vadd.xlane.f32.xlu0 %v1026
      %v1028 = vpop.xlane.xlu0 %1027
      %v1029 = vsel %vm587, %v1019, 0.0
      %1030 = vadd.xlane.f32.xlu0 %v1029
      %v1031 = vpop.xlane.xlu0 %1030
      %v1032 = vrcp.pop %v1022
      %v1033 = vmul.f32 %v1016, %v1032
      %v1034 = vrcp.pop %v1025
      %v1035 = vmul.f32 %v1017, %v1034
      %v1036 = vrcp.pop %v1028
      %v1037 = vmul.f32 %v1018, %v1036
      %v1038 = vrcp.pop %v1031
      %v1039 = vmul.f32 %v1019, %v1038
      %v1041 = vsel %vm587, %v1033, 0
      %v1044 = vsel %vm587, %v1035, 0
      %v1047 = vsel %vm587, %v1037, 0
      %v1050 = vsel %vm587, %v1039, 0
      %1052 = vmatprep.subr.mxu0 0.0
      %1053 = vmatpush1.msra.mxu0 0.0
      %1054 = vmatprep.subr.mxu0 0.0
      %1055 = vmatpush1.msra.mxu0 0.0
      %1056 = vmatprep.subr.mxu0 0.0
      %1057 = vmatpush1.msra.mxu0 0.0
      %1058 = vmatprep.subr.mxu0 0.0
      %1059 = vmatpush1.msra.mxu0 0.0
      %1060 = vmatprep.subr.mxu0 0.0
      %1061 = vmatpush1.msra.mxu0 0.0
      %1062 = vmatprep.subr.mxu0 0.0
      %1063 = vmatpush1.msra.mxu0 0.0
      %1064 = vmatprep.subr.mxu0 0.0
      %1065 = vmatpush1.msra.mxu0 0.0
      %1066 = vmatprep.subr.mxu0 0.0
      %1067 = vmatpush1.msra.mxu0 0.0
      %1068 = vmatprep.subr.mxu0 0.0
      %1069 = vmatpush1.msra.mxu0 0.0
      %1070 = vmatprep.subr.mxu0 0.0
      %1071 = vmatpush1.msra.mxu0 0.0
      %1072 = vmatprep.subr.mxu0 0.0
      %1073 = vmatpush1.msra.mxu0 0.0
      %1074 = vmatprep.subr.mxu0 0.0
      %1075 = vmatpush1.msra.mxu0 0.0
      %1076 = vmatprep.subr.mxu0 0.0
      %1077 = vmatpush1.msra.mxu0 0.0
      %1078 = vmatprep.subr.mxu0 0.0
      %1079 = vmatpush1.msra.mxu0 0.0
      %1080 = vmatprep.subr.mxu0 0.0
      %1081 = vmatpush1.msra.mxu0 0.0
      %1082 = vmatprep.subr.mxu0 0.0
      %1083 = vmatpush1.msra.mxu0 %v400
      %1084 = vmatprep.subr.mxu0 0.0
      %1085 = vmatpush2.msra.mxu0 0.0
      %1086 = vmatprep.subr.mxu0 0.0
      %1087 = vmatpush2.msra.mxu0 0.0
      %1088 = vmatprep.subr.mxu0 0.0
      %1089 = vmatpush2.msra.mxu0 0.0
      %1090 = vmatprep.subr.mxu0 0.0
      %1091 = vmatpush2.msra.mxu0 0.0
      %1092 = vmatprep.subr.mxu0 0.0
      %1093 = vmatpush2.msra.mxu0 0.0
      %1094 = vmatprep.subr.mxu0 0.0
      %1095 = vmatpush2.msra.mxu0 0.0
      %1096 = vmatprep.subr.mxu0 0.0
      %1097 = vmatpush2.msra.mxu0 0.0
      %1098 = vmatprep.subr.mxu0 0.0
      %1099 = vmatpush2.msra.mxu0 0.0
      %1100 = vmatprep.subr.mxu0 0.0
      %1101 = vmatpush2.msra.mxu0 0.0
      %1102 = vmatprep.subr.mxu0 0.0
      %1103 = vmatpush2.msra.mxu0 0.0
      %1104 = vmatprep.subr.mxu0 0.0
      %1105 = vmatpush2.msra.mxu0 0.0
      %1106 = vmatprep.subr.mxu0 0.0
      %1107 = vmatpush2.msra.mxu0 0.0
      %1108 = vmatprep.subr.mxu0 0.0
      %1109 = vmatpush2.msra.mxu0 0.0
      %1110 = vmatprep.subr.mxu0 0.0
      %1111 = vmatpush2.msra.mxu0 0.0
      %1112 = vmatprep.subr.mxu0 0.0
      %1113 = vmatpush2.msra.mxu0 0.0
      %1114 = vmatprep.subr.mxu0 0.0
      %1115 = vmatpush2.msra.mxu0 0.0
      %1116 = vmatprep.mubr.f32.mxu0 0.0
      %1117 = vmatmul.mubr.f32.gmra.mxu0 %v1041
      %v1118 = vpop.f32.mrf.mxu0
      %v1119 = vadd.f32 0.0, %v1118
      %v1120 = vpop.f32.mrf.mxu0
      %1121 = vmatprep.mubr.f32.mxu0 0.0
      %1122 = vmatmul.mubr.f32.gmra.mxu0 %v1044
      %v1123 = vpop.f32.mrf.mxu0
      %v1124 = vadd.f32 0.0, %v1123
      %v1125 = vpop.f32.mrf.mxu0
      %1126 = vmatprep.mubr.f32.mxu0 0.0
      %1127 = vmatmul.mubr.f32.gmra.mxu0 %v1047
      %v1128 = vpop.f32.mrf.mxu0
      %v1129 = vadd.f32 0.0, %v1128
      %v1130 = vpop.f32.mrf.mxu0
      %1131 = vmatprep.mubr.f32.mxu0 0.0
      %1132 = vmatmul.mubr.f32.gmra.mxu0 %v1050
      %v1133 = vpop.f32.mrf.mxu0
      %v1134 = vadd.f32 0.0, %v1133
      %v1135 = vpop.f32.mrf.mxu0
      %1136 = vdwg.mxu0
      %v1137 = vld [vmem:[%s6] sm:$0xff]
      %v1138 = vld [vmem:[%s6 + $0x8] sm:$0xff]
      %v1139 = vld [vmem:[%s6 + $0x10] sm:$0xff]
      %v1140 = vld [vmem:[%s6 + $0x18] sm:$0xff]
      %v1142 = vsel %vm510, %v1119, 0
      %v1145 = vsel %vm510, %v1137, 0
      %1147 = vmatprep.subr.mxu0 0.0
      %1148 = vmatpush1.xpose.msra.mxu0 0.0
      %1149 = vmatprep.subr.mxu0 0.0
      %1150 = vmatpush1.xpose.msra.mxu0 0.0
      %1151 = vmatprep.subr.mxu0 0.0
      %1152 = vmatpush1.xpose.msra.mxu0 0.0
      %1153 = vmatprep.subr.mxu0 0.0
      %1154 = vmatpush1.xpose.msra.mxu0 0.0
      %1155 = vmatprep.subr.mxu0 0.0
      %1156 = vmatpush1.xpose.msra.mxu0 0.0
      %1157 = vmatprep.subr.mxu0 0.0
      %1158 = vmatpush1.xpose.msra.mxu0 0.0
      %1159 = vmatprep.subr.mxu0 0.0
      %1160 = vmatpush1.xpose.msra.mxu0 0.0
      %1161 = vmatprep.subr.mxu0 0.0
      %1162 = vmatpush1.xpose.msra.mxu0 0.0
      %1163 = vmatprep.subr.mxu0 0.0
      %1164 = vmatpush1.xpose.msra.mxu0 0.0
      %1165 = vmatprep.subr.mxu0 0.0
      %1166 = vmatpush1.xpose.msra.mxu0 0.0
      %1167 = vmatprep.subr.mxu0 0.0
      %1168 = vmatpush1.xpose.msra.mxu0 0.0
      %1169 = vmatprep.subr.mxu0 0.0
      %1170 = vmatpush1.xpose.msra.mxu0 0.0
      %1171 = vmatprep.subr.mxu0 0.0
      %1172 = vmatpush1.xpose.msra.mxu0 0.0
      %1173 = vmatprep.subr.mxu0 0.0
      %1174 = vmatpush1.xpose.msra.mxu0 0.0
      %1175 = vmatprep.subr.mxu0 0.0
      %1176 = vmatpush1.xpose.msra.mxu0 0.0
      %1177 = vmatprep.subr.mxu0 0.0
      %1178 = vmatpush1.xpose.msra.mxu0 %v1145
      %1179 = vmatprep.subr.mxu0 0.0
      %1180 = vmatpush2.xpose.msra.mxu0 0.0
      %1181 = vmatprep.subr.mxu0 0.0
      %1182 = vmatpush2.xpose.msra.mxu0 0.0
      %1183 = vmatprep.subr.mxu0 0.0
      %1184 = vmatpush2.xpose.msra.mxu0 0.0
      %1185 = vmatprep.subr.mxu0 0.0
      %1186 = vmatpush2.xpose.msra.mxu0 0.0
      %1187 = vmatprep.subr.mxu0 0.0
      %1188 = vmatpush2.xpose.msra.mxu0 0.0
      %1189 = vmatprep.subr.mxu0 0.0
      %1190 = vmatpush2.xpose.msra.mxu0 0.0
      %1191 = vmatprep.subr.mxu0 0.0
      %1192 = vmatpush2.xpose.msra.mxu0 0.0
      %1193 = vmatprep.subr.mxu0 0.0
      %1194 = vmatpush2.xpose.msra.mxu0 0.0
      %1195 = vmatprep.subr.mxu0 0.0
      %1196 = vmatpush2.xpose.msra.mxu0 0.0
      %1197 = vmatprep.subr.mxu0 0.0
      %1198 = vmatpush2.xpose.msra.mxu0 0.0
      %1199 = vmatprep.subr.mxu0 0.0
      %1200 = vmatpush2.xpose.msra.mxu0 0.0
      %1201 = vmatprep.subr.mxu0 0.0
      %1202 = vmatpush2.xpose.msra.mxu0 0.0
      %1203 = vmatprep.subr.mxu0 0.0
      %1204 = vmatpush2.xpose.msra.mxu0 0.0
      %1205 = vmatprep.subr.mxu0 0.0
      %1206 = vmatpush2.xpose.msra.mxu0 0.0
      %1207 = vmatprep.subr.mxu0 0.0
      %1208 = vmatpush2.xpose.msra.mxu0 0.0
      %1209 = vmatprep.subr.mxu0 0.0
      %1210 = vmatpush2.xpose.msra.mxu0 0.0
      %1211 = vmatprep.mubr.f32.mxu0 0.0
      %1212 = vmatmul.mubr.f32.gmra.mxu0 %v1142
      %v1213 = vpop.f32.mrf.mxu0
      %v1214 = vadd.f32 0.0, %v1213
      %v1215 = vpop.f32.mrf.mxu0
      %1216 = vdwg.mxu0
      %v1218 = vsel %vm510, %v1124, 0
      %v1221 = vsel %vm510, %v1138, 0
      %1223 = vmatprep.subr.mxu0 0.0
      %1224 = vmatpush1.xpose.msra.mxu0 0.0
      %1225 = vmatprep.subr.mxu0 0.0
      %1226 = vmatpush1.xpose.msra.mxu0 0.0
      %1227 = vmatprep.subr.mxu0 0.0
      %1228 = vmatpush1.xpose.msra.mxu0 0.0
      %1229 = vmatprep.subr.mxu0 0.0
      %1230 = vmatpush1.xpose.msra.mxu0 0.0
      %1231 = vmatprep.subr.mxu0 0.0
      %1232 = vmatpush1.xpose.msra.mxu0 0.0
      %1233 = vmatprep.subr.mxu0 0.0
      %1234 = vmatpush1.xpose.msra.mxu0 0.0
      %1235 = vmatprep.subr.mxu0 0.0
      %1236 = vmatpush1.xpose.msra.mxu0 0.0
      %1237 = vmatprep.subr.mxu0 0.0
      %1238 = vmatpush1.xpose.msra.mxu0 0.0
      %1239 = vmatprep.subr.mxu0 0.0
      %1240 = vmatpush1.xpose.msra.mxu0 0.0
      %1241 = vmatprep.subr.mxu0 0.0
      %1242 = vmatpush1.xpose.msra.mxu0 0.0
      %1243 = vmatprep.subr.mxu0 0.0
      %1244 = vmatpush1.xpose.msra.mxu0 0.0
      %1245 = vmatprep.subr.mxu0 0.0
      %1246 = vmatpush1.xpose.msra.mxu0 0.0
      %1247 = vmatprep.subr.mxu0 0.0
      %1248 = vmatpush1.xpose.msra.mxu0 0.0
      %1249 = vmatprep.subr.mxu0 0.0
      %1250 = vmatpush1.xpose.msra.mxu0 0.0
      %1251 = vmatprep.subr.mxu0 0.0
      %1252 = vmatpush1.xpose.msra.mxu0 0.0
      %1253 = vmatprep.subr.mxu0 0.0
      %1254 = vmatpush1.xpose.msra.mxu0 %v1221
      %1255 = vmatprep.subr.mxu0 0.0
      %1256 = vmatpush2.xpose.msra.mxu0 0.0
      %1257 = vmatprep.subr.mxu0 0.0
      %1258 = vmatpush2.xpose.msra.mxu0 0.0
      %1259 = vmatprep.subr.mxu0 0.0
      %1260 = vmatpush2.xpose.msra.mxu0 0.0
      %1261 = vmatprep.subr.mxu0 0.0
      %1262 = vmatpush2.xpose.msra.mxu0 0.0
      %1263 = vmatprep.subr.mxu0 0.0
      %1264 = vmatpush2.xpose.msra.mxu0 0.0
      %1265 = vmatprep.subr.mxu0 0.0
      %1266 = vmatpush2.xpose.msra.mxu0 0.0
      %1267 = vmatprep.subr.mxu0 0.0
      %1268 = vmatpush2.xpose.msra.mxu0 0.0
      %1269 = vmatprep.subr.mxu0 0.0
      %1270 = vmatpush2.xpose.msra.mxu0 0.0
      %1271 = vmatprep.subr.mxu0 0.0
      %1272 = vmatpush2.xpose.msra.mxu0 0.0
      %1273 = vmatprep.subr.mxu0 0.0
      %1274 = vmatpush2.xpose.msra.mxu0 0.0
      %1275 = vmatprep.subr.mxu0 0.0
      %1276 = vmatpush2.xpose.msra.mxu0 0.0
      %1277 = vmatprep.subr.mxu0 0.0
      %1278 = vmatpush2.xpose.msra.mxu0 0.0
      %1279 = vmatprep.subr.mxu0 0.0
      %1280 = vmatpush2.xpose.msra.mxu0 0.0
      %1281 = vmatprep.subr.mxu0 0.0
      %1282 = vmatpush2.xpose.msra.mxu0 0.0
      %1283 = vmatprep.subr.mxu0 0.0
      %1284 = vmatpush2.xpose.msra.mxu0 0.0
      %1285 = vmatprep.subr.mxu0 0.0
      %1286 = vmatpush2.xpose.msra.mxu0 0.0
      %1287 = vmatprep.mubr.f32.mxu0 0.0
      %1288 = vmatmul.mubr.f32.gmra.mxu0 %v1218
      %v1289 = vpop.f32.mrf.mxu0
      %v1290 = vadd.f32 0.0, %v1289
      %v1291 = vpop.f32.mrf.mxu0
      %1292 = vdwg.mxu0
      %v1294 = vsel %vm510, %v1129, 0
      %v1297 = vsel %vm510, %v1139, 0
      %1299 = vmatprep.subr.mxu0 0.0
      %1300 = vmatpush1.xpose.msra.mxu0 0.0
      %1301 = vmatprep.subr.mxu0 0.0
      %1302 = vmatpush1.xpose.msra.mxu0 0.0
      %1303 = vmatprep.subr.mxu0 0.0
      %1304 = vmatpush1.xpose.msra.mxu0 0.0
      %1305 = vmatprep.subr.mxu0 0.0
      %1306 = vmatpush1.xpose.msra.mxu0 0.0
      %1307 = vmatprep.subr.mxu0 0.0
      %1308 = vmatpush1.xpose.msra.mxu0 0.0
      %1309 = vmatprep.subr.mxu0 0.0
      %1310 = vmatpush1.xpose.msra.mxu0 0.0
      %1311 = vmatprep.subr.mxu0 0.0
      %1312 = vmatpush1.xpose.msra.mxu0 0.0
      %1313 = vmatprep.subr.mxu0 0.0
      %1314 = vmatpush1.xpose.msra.mxu0 0.0
      %1315 = vmatprep.subr.mxu0 0.0
      %1316 = vmatpush1.xpose.msra.mxu0 0.0
      %1317 = vmatprep.subr.mxu0 0.0
      %1318 = vmatpush1.xpose.msra.mxu0 0.0
      %1319 = vmatprep.subr.mxu0 0.0
      %1320 = vmatpush1.xpose.msra.mxu0 0.0
      %1321 = vmatprep.subr.mxu0 0.0
      %1322 = vmatpush1.xpose.msra.mxu0 0.0
      %1323 = vmatprep.subr.mxu0 0.0
      %1324 = vmatpush1.xpose.msra.mxu0 0.0
      %1325 = vmatprep.subr.mxu0 0.0
      %1326 = vmatpush1.xpose.msra.mxu0 0.0
      %1327 = vmatprep.subr.mxu0 0.0
      %1328 = vmatpush1.xpose.msra.mxu0 0.0
      %1329 = vmatprep.subr.mxu0 0.0
      %1330 = vmatpush1.xpose.msra.mxu0 %v1297
      %1331 = vmatprep.subr.mxu0 0.0
      %1332 = vmatpush2.xpose.msra.mxu0 0.0
      %1333 = vmatprep.subr.mxu0 0.0
      %1334 = vmatpush2.xpose.msra.mxu0 0.0
      %1335 = vmatprep.subr.mxu0 0.0
      %1336 = vmatpush2.xpose.msra.mxu0 0.0
      %1337 = vmatprep.subr.mxu0 0.0
      %1338 = vmatpush2.xpose.msra.mxu0 0.0
      %1339 = vmatprep.subr.mxu0 0.0
      %1340 = vmatpush2.xpose.msra.mxu0 0.0
      %1341 = vmatprep.subr.mxu0 0.0
      %1342 = vmatpush2.xpose.msra.mxu0 0.0
      %1343 = vmatprep.subr.mxu0 0.0
      %1344 = vmatpush2.xpose.msra.mxu0 0.0
      %1345 = vmatprep.subr.mxu0 0.0
      %1346 = vmatpush2.xpose.msra.mxu0 0.0
      %1347 = vmatprep.subr.mxu0 0.0
      %1348 = vmatpush2.xpose.msra.mxu0 0.0
      %1349 = vmatprep.subr.mxu0 0.0
      %1350 = vmatpush2.xpose.msra.mxu0 0.0
      %1351 = vmatprep.subr.mxu0 0.0
      %1352 = vmatpush2.xpose.msra.mxu0 0.0
      %1353 = vmatprep.subr.mxu0 0.0
      %1354 = vmatpush2.xpose.msra.mxu0 0.0
      %1355 = vmatprep.subr.mxu0 0.0
      %1356 = vmatpush2.xpose.msra.mxu0 0.0
      %1357 = vmatprep.subr.mxu0 0.0
      %1358 = vmatpush2.xpose.msra.mxu0 0.0
      %1359 = vmatprep.subr.mxu0 0.0
      %1360 = vmatpush2.xpose.msra.mxu0 0.0
      %1361 = vmatprep.subr.mxu0 0.0
      %1362 = vmatpush2.xpose.msra.mxu0 0.0
      %1363 = vmatprep.mubr.f32.mxu0 0.0
      %1364 = vmatmul.mubr.f32.gmra.mxu0 %v1294
      %v1365 = vpop.f32.mrf.mxu0
      %v1366 = vadd.f32 0.0, %v1365
      %v1367 = vpop.f32.mrf.mxu0
      %1368 = vdwg.mxu0
      %v1370 = vsel %vm510, %v1134, 0
      %v1373 = vsel %vm510, %v1140, 0
      %1375 = vmatprep.subr.mxu0 0.0
      %1376 = vmatpush1.xpose.msra.mxu0 0.0
      %1377 = vmatprep.subr.mxu0 0.0
      %1378 = vmatpush1.xpose.msra.mxu0 0.0
      %1379 = vmatprep.subr.mxu0 0.0
      %1380 = vmatpush1.xpose.msra.mxu0 0.0
      %1381 = vmatprep.subr.mxu0 0.0
      %1382 = vmatpush1.xpose.msra.mxu0 0.0
      %1383 = vmatprep.subr.mxu0 0.0
      %1384 = vmatpush1.xpose.msra.mxu0 0.0
      %1385 = vmatprep.subr.mxu0 0.0
      %1386 = vmatpush1.xpose.msra.mxu0 0.0
      %1387 = vmatprep.subr.mxu0 0.0
      %1388 = vmatpush1.xpose.msra.mxu0 0.0
      %1389 = vmatprep.subr.mxu0 0.0
      %1390 = vmatpush1.xpose.msra.mxu0 0.0
      %1391 = vmatprep.subr.mxu0 0.0
      %1392 = vmatpush1.xpose.msra.mxu0 0.0
      %1393 = vmatprep.subr.mxu0 0.0
      %1394 = vmatpush1.xpose.msra.mxu0 0.0
      %1395 = vmatprep.subr.mxu0 0.0
      %1396 = vmatpush1.xpose.msra.mxu0 0.0
      %1397 = vmatprep.subr.mxu0 0.0
      %1398 = vmatpush1.xpose.msra.mxu0 0.0
      %1399 = vmatprep.subr.mxu0 0.0
      %1400 = vmatpush1.xpose.msra.mxu0 0.0
      %1401 = vmatprep.subr.mxu0 0.0
      %1402 = vmatpush1.xpose.msra.mxu0 0.0
      %1403 = vmatprep.subr.mxu0 0.0
      %1404 = vmatpush1.xpose.msra.mxu0 0.0
      %1405 = vmatprep.subr.mxu0 0.0
      %1406 = vmatpush1.xpose.msra.mxu0 %v1373
      %1407 = vmatprep.subr.mxu0 0.0
      %1408 = vmatpush2.xpose.msra.mxu0 0.0
      %1409 = vmatprep.subr.mxu0 0.0
      %1410 = vmatpush2.xpose.msra.mxu0 0.0
      %1411 = vmatprep.subr.mxu0 0.0
      %1412 = vmatpush2.xpose.msra.mxu0 0.0
      %1413 = vmatprep.subr.mxu0 0.0
      %1414 = vmatpush2.xpose.msra.mxu0 0.0
      %1415 = vmatprep.subr.mxu0 0.0
      %1416 = vmatpush2.xpose.msra.mxu0 0.0
      %1417 = vmatprep.subr.mxu0 0.0
      %1418 = vmatpush2.xpose.msra.mxu0 0.0
      %1419 = vmatprep.subr.mxu0 0.0
      %1420 = vmatpush2.xpose.msra.mxu0 0.0
      %1421 = vmatprep.subr.mxu0 0.0
      %1422 = vmatpush2.xpose.msra.mxu0 0.0
      %1423 = vmatprep.subr.mxu0 0.0
      %1424 = vmatpush2.xpose.msra.mxu0 0.0
      %1425 = vmatprep.subr.mxu0 0.0
      %1426 = vmatpush2.xpose.msra.mxu0 0.0
      %1427 = vmatprep.subr.mxu0 0.0
      %1428 = vmatpush2.xpose.msra.mxu0 0.0
      %1429 = vmatprep.subr.mxu0 0.0
      %1430 = vmatpush2.xpose.msra.mxu0 0.0
      %1431 = vmatprep.subr.mxu0 0.0
      %1432 = vmatpush2.xpose.msra.mxu0 0.0
      %1433 = vmatprep.subr.mxu0 0.0
      %1434 = vmatpush2.xpose.msra.mxu0 0.0
      %1435 = vmatprep.subr.mxu0 0.0
      %1436 = vmatpush2.xpose.msra.mxu0 0.0
      %1437 = vmatprep.subr.mxu0 0.0
      %1438 = vmatpush2.xpose.msra.mxu0 0.0
      %1439 = vmatprep.mubr.f32.mxu0 0.0
      %1440 = vmatmul.mubr.f32.gmra.mxu0 %v1370
      %v1441 = vpop.f32.mrf.mxu0
      %v1442 = vadd.f32 0.0, %v1441
      %v1443 = vpop.f32.mrf.mxu0
      %1444 = vdwg.mxu0
      %1446 = vrot.lane.b32.xlu0 %v1290, 8
      %v1447 = vpop.permute.xlu0 %1446
      %1450 = vrot.lane.b32.xlu0 %v1366, 16
      %v1451 = vpop.permute.xlu0 %1450
      %1454 = vrot.lane.b32.xlu0 %v1442, 24
      %v1455 = vpop.permute.xlu0 %1454
      %v1457 = vsel %vm587, %v1214, %v1447
      %vm1458 = vcmask 130048
      %v1459 = vsel %vm1458, %v1457, %v1451
      %vm1460 = vcmask 195584
      %v1461 = vsel %vm1460, %v1459, %v1455
      %v1462 = vld [vmem:[%s7] sm:$0x1]
      %v1464 = vlaneseq
      %v1465 = vshrl.u32 %v1464, 7
      %v1466 = vsub.s32 0, %v1465
      %v1467 = vrot.slane %v1462, %v1466
      %v1469 = vadd.f32 %v1461, %v1467
      %1470 = vst.msk [vmem:[%s399] sm:$0xff] %vm510, %v1469
      %p1471 = scmp.lt.s32.totalorder %s19, 1
      %s1472 = scalar_select %p1471, %s19, 1
      %s1473 = smul.addr %s1472, 8
      %s1474 = scalar_lea.vmem %s8, %s1473
      // Predicated region
      $region53: #{cls_wise_relation_forward.1} parent=51 // pred_check
        %p1475 = pneg %p237
      $region54: #{cls_wise_relation_forward.1} parent=51 // pred_check_branch
        %1477 = sbr.rel (%p1475) target = $region56
      $region55: #{cls_wise_relation_forward.1} parent=51 // pred_region
        _
      $region56: #{cls_wise_relation_forward.1} parent=51 // pred_fallthru
        _
    $region52: #{cls_wise_relation_forward.1} parent=5 // pred_fallthru
      _
    %p1478 = scmp.le.s32.totalorder 2, %s14
    // Predicated region
    $region57: #{cls_wise_relation_forward.1} parent=5 // pred_check
      %p1479 = pneg %p1478
    $region58: #{cls_wise_relation_forward.1} parent=5 // pred_check_branch
      %1481 = sbr.rel (%p1479) target = $region60
    $region59: #{cls_wise_relation_forward.1} parent=5 // pred_region
      %s1482 = ssub.s32 %s14, 2
      // Predicated region
      $region61: #{cls_wise_relation_forward.1} parent=59 // pred_check
        %p1483 = pneg %p243
      $region62: #{cls_wise_relation_forward.1} parent=59 // pred_check_branch
        %1485 = sbr.rel (%p1483) target = $region64
      $region63: #{cls_wise_relation_forward.1} parent=59 // pred_region
        %p1486 = scmp.lt.s32.totalorder %s20, 1
        %s1487 = scalar_select %p1486, %s20, 1
        %s1488 = smul.addr %s1487, 8
        %s1489 = scalar_lea.vmem %s8, %s1488
      $region64: #{cls_wise_relation_forward.1} parent=59 // pred_fallthru
        _
    $region60: #{cls_wise_relation_forward.1} parent=5 // pred_fallthru
      _
  $region6: #{cls_wise_relation_forward.1} parent=0 // loop_footer
    %s18 = sadd.s32 1, %s14
  $region7: #{cls_wise_relation_forward.1} parent=0 // loop_footer_branch
    %13 = sbr.rel target = $region3
  $region8: #{cls_wise_relation_forward.1} parent=0 // loop_exit
    _

</llo_original>
